<compile_context>
chip_gen: v6e
topology: v6e:2x2x1
jax: 0.10.0
libtpu: 0.0.40
codegen_flags: <defaults>
</compile_context>

<pallas_src>
import jax
import jax.numpy as jnp
from jax import lax
from jax.experimental import pallas as pl
from jax.experimental.pallas import tpu as pltpu

EPS = 1e-5
KH = KW = 3
LANE = 128


def double_conv_kernel(x_ref, w1_ref, w2_ref, gmat_ref, gtmat_ref,
                       g1_ref, b1_ref, g2_ref, b2_ref,
                       o_ref, slab1_ref, slab2_ref):
    # x_ref     : (N, H, WC1)      f32, (w, channel) flattened on the lane axis
    # w1_ref    : (3*WC1, WC2)     bf16 K-fused block-banded conv1 weights
    # w2_ref    : (3*WC2, WC2)     bf16 K-fused block-banded conv2 weights
    # gmat_ref  : (WC2, Cout)      f32 0/1 column -> channel folding matrix
    # gtmat_ref : (Cout, WC2)      f32 channel -> column expansion matrix
    # g*/b*     : (1, Cout)        f32 BatchNorm affine params
    # o_ref     : (N*H, WC2)       f32 lane-dense output slab
    # slab1/2   : (N, H+2, 3*WC*)  bf16 scratch: H-shifted im2row slabs
    N, H, WC1 = x_ref.shape
    NH, WC2 = o_ref.shape
    Cout = gmat_ref.shape[1]
    W = WC2 // Cout
    inv_m = 1.0 / (NH * W)          # number of (n, h, w) positions per channel

    def build_slab(x3d, slab_ref, wc):
        # slab[n, 1+h, d*wc:(d+1)*wc] = x[n, h+d-1, :]; 'same' H padding is realized
        # by the two single-row zero halos. Only full-H stores at sublane offsets
        # 0/1/2 (rows outside the read window [1, H] are never read). Cast once.
        xb = x3d.astype(jnp.bfloat16)
        zrow = jnp.zeros((N, 1, wc), jnp.bfloat16)
        slab_ref[:, 2:H + 2, 0 * wc:1 * wc] = xb      # d=0 : x[h-1]
        slab_ref[:, 1:2,     0 * wc:1 * wc] = zrow    #       top halo
        slab_ref[:, 1:H + 1, 1 * wc:2 * wc] = xb      # d=1 : x[h]
        slab_ref[:, 0:H,     2 * wc:3 * wc] = xb      # d=2 : x[h+1]
        slab_ref[:, H:H + 1, 2 * wc:3 * wc] = zrow    #       bottom halo

    def conv3x3(slab_ref, w_ref, wc):
        # One K = 3*wc bf16 matmul per conv, f32 accumulation on the MXU.
        a = slab_ref[:, 1:H + 1, :].reshape(NH, 3 * wc)
        return jnp.dot(a, w_ref[...], preferred_element_type=jnp.float32)

    def bn_relu(y, gamma_ref, beta_ref):
        # Training-mode BatchNorm (biased batch variance), forward only, all f32.
        # Stats via sublane (XLU) reduction; tiny 8-row matmuls fold (w,c) columns
        # onto channels and expand the per-channel scale/shift back to one lane row.
        s8 = jnp.broadcast_to(jnp.sum(y, axis=0, keepdims=True), (8, WC2))
        ss8 = jnp.broadcast_to(jnp.sum(y * y, axis=0, keepdims=True), (8, WC2))
        s_c = jnp.dot(s8, gmat_ref[...], preferred_element_type=jnp.float32)    # (8, Cout)
        ss_c = jnp.dot(ss8, gmat_ref[...], preferred_element_type=jnp.float32)  # (8, Cout)
        mean_c = s_c * inv_m
        var_c = jnp.maximum(ss_c * inv_m - mean_c * mean_c, 0.0)   # clamp >= 0
        scale_c = gamma_ref[...] * lax.rsqrt(var_c + EPS)
        shift_c = beta_ref[...] - mean_c * scale_c
        scale = jnp.dot(scale_c, gtmat_ref[...],
                        preferred_element_type=jnp.float32)[0:1]   # (1, WC2)
        shift = jnp.dot(shift_c, gtmat_ref[...],
                        preferred_element_type=jnp.float32)[0:1]
        # (1, WC2) rows broadcast over sublanes for free in the VPU op below.
        return jnp.maximum(y * scale + shift, 0.0)

    # conv1 (single K = 3*WC1 matmul) + BN1 + ReLU
    build_slab(x_ref[...], slab1_ref, WC1)
    y1 = bn_relu(conv3x3(slab1_ref, w1_ref, WC1), g1_ref, b1_ref)

    # conv2 (single K = 3*WC2 matmul) + BN2 + ReLU
    build_slab(y1.reshape(N, H, WC2), slab2_ref, WC2)
    y2 = bn_relu(conv3x3(slab2_ref, w2_ref, WC2), g2_ref, b2_ref)

    o_ref[...] = y2.astype(o_ref.dtype)


def _pad_cin_for_lanes(cin, w):
    # Smallest cin_p >= cin such that w * cin_p is a multiple of 128 lanes.
    cp = cin
    while (w * cp) % LANE != 0:
        cp += 1
    return cp


def build_fused_banded_weight(w_oihw, W, cin_pad):
    """(Cout, Cin, 3, 3) OIHW weights -> (3*W*cin_pad, W*Cout) K-fused banded matrix.

    Row [dh*W*cin_pad + wi*cin_pad + ci], col [wo*Cout + co] holds w[co, ci, dh, dw]
    for dw = wi - wo + 1 in [0, 3); all other entries (including zero-padded input
    channels) are zero, which also realizes the 'same' zero padding along W.
    Row block dh pairs with the x[h + dh - 1] block of the in-kernel im2row slab.
    """
    Cout, Cin, kh, kw = w_oihw.shape
    wk = jnp.transpose(w_oihw, (2, 3, 1, 0)).astype(jnp.float32)   # (dh, dw, Cin, Cout)
    B = jnp.zeros((kh, W * cin_pad, W * Cout), jnp.float32)
    for dw in range(kw):
        for wo in range(W):
            wi = wo + dw - 1
            if 0 <= wi < W:
                B = B.at[:, wi * cin_pad:wi * cin_pad + Cin,
                         wo * Cout:(wo + 1) * Cout].set(wk[:, dw])
    return B.reshape(kh * W * cin_pad, W * Cout)


def double_conv(x_nchw, w1, g1, b1, w2, g2, b2):
    """x_nchw: (N, Cin, H, W); w*: PyTorch OIHW (Cout, Cin/Cout, 3, 3) conv weights."""
    N, Cin, H, W = x_nchw.shape
    Cout = w1.shape[0]
    assert (W * Cout) % LANE == 0, "lane-dense layout requires W*Cout % 128 == 0"
    # TODO(synk): generalize the output layout when W*Cout is not a 128-lane multiple.
    cin_p = _pad_cin_for_lanes(Cin, W)

    # NCHW -> (N, H, W*cin_p): image rows with (w, channel) flattened onto lanes; the
    # channel axis is zero-padded so every lane block is 128-aligned.
    # TODO(synk): at realistic sizes fuse these NCHW<->NHWC transposes into the
    # producer/consumer layouts instead of extra HBM passes.
    x_nhwc = jnp.transpose(x_nchw, (0, 2, 3, 1))
    if cin_p != Cin:
        x_nhwc = jnp.pad(x_nhwc, ((0, 0), (0, 0), (0, 0), (0, cin_p - Cin)))
    x_rows = x_nhwc.reshape(N, H, W * cin_p)

    w1b = build_fused_banded_weight(w1, W, cin_p).astype(jnp.bfloat16)  # (3*W*cin_p, W*Cout)
    w2b = build_fused_banded_weight(w2, W, Cout).astype(jnp.bfloat16)   # (3*W*Cout,  W*Cout)

    gmat = jnp.tile(jnp.eye(Cout, dtype=jnp.float32), (W, 1))           # (W*Cout, Cout)
    gtmat = jnp.transpose(gmat)                                         # (Cout, W*Cout)

    WC1, WC2 = W * cin_p, W * Cout
    out2d = pl.pallas_call(
        double_conv_kernel,
        out_shape=jax.ShapeDtypeStruct((N * H, WC2), jnp.float32),
        in_specs=[pl.BlockSpec(memory_space=pltpu.MemorySpace.VMEM)] * 9,
        out_specs=pl.BlockSpec(memory_space=pltpu.MemorySpace.VMEM),
        scratch_shapes=[pltpu.VMEM((N, H + 2, 3 * WC1), jnp.bfloat16),
                        pltpu.VMEM((N, H + 2, 3 * WC2), jnp.bfloat16)],
    )(x_rows, w1b, w2b, gmat, gtmat,
      g1.reshape(1, Cout).astype(jnp.float32),
      b1.reshape(1, Cout).astype(jnp.float32),
      g2.reshape(1, Cout).astype(jnp.float32),
      b2.reshape(1, Cout).astype(jnp.float32))

    out_nhwc = out2d.reshape(N, H, W, Cout)
    return jnp.transpose(out_nhwc, (0, 3, 1, 2))                        # -> NCHW


def reference_double_conv(x, w1, g1, b1, w2, g2, b2, quantize_bf16=False):
    """Pure-JAX NCHW reference matching the PyTorch module (training-mode BN forward).

    With quantize_bf16=True the conv operands are rounded to bf16 first, matching the
    kernel's MXU operand precision (bf16 products are exact, accumulation in f32).
    """
    def q(a):
        return a.astype(jnp.bfloat16).astype(jnp.float32) if quantize_bf16 else a

    def conv(t, w):
        return lax.conv_general_dilated(
            q(t), q(w), window_strides=(1, 1), padding='SAME',
            dimension_numbers=('NCHW', 'OIHW', 'NCHW'))

    def bn_relu(y, g, b):
        mean = jnp.mean(y, axis=(0, 2, 3), keepdims=True)
        var = jnp.mean((y - mean) ** 2, axis=(0, 2, 3), keepdims=True)
        yhat = (y - mean) * lax.rsqrt(var + EPS)
        yhat = yhat * g.reshape(1, -1, 1, 1) + b.reshape(1, -1, 1, 1)
        return jnp.maximum(yhat, 0.0)

    y = bn_relu(conv(x, w1), g1, b1)
    return bn_relu(conv(y, w2), g2, b2)


if __name__ == "__main__":
    key = jax.random.PRNGKey(0)
    kx, kw1, kw2 = jax.random.split(key, 3)

    N, Cin, Cout, H, W = 2, 4, 8, 16, 16

    x = jax.random.normal(kx, (N, Cin, H, W), jnp.float32)
    # PyTorch-shaped (OIHW) conv weights; BatchNorm2d default init: weight=1, bias=0.
    w1 = jax.random.normal(kw1, (Cout, Cin, KH, KW), jnp.float32) * 0.1
    w2 = jax.random.normal(kw2, (Cout, Cout, KH, KW), jnp.float32) * 0.1
    g1 = jnp.ones((Cout,), jnp.float32)
    b1 = jnp.zeros((Cout,), jnp.float32)
    g2 = jnp.ones((Cout,), jnp.float32)
    b2 = jnp.zeros((Cout,), jnp.float32)

    out = jax.block_until_ready(double_conv(x, w1, g1, b1, w2, g2, b2))
    assert out.shape == (N, Cout, H, W), out.shape

    # Tight check against a reference using the same bf16 MXU-operand quantization.
    ref_q = reference_double_conv(x, w1, g1, b1, w2, g2, b2, quantize_bf16=True)
    err_q = float(jnp.max(jnp.abs(out - ref_q)))
    assert jnp.allclose(out, ref_q, atol=5e-3, rtol=5e-3), err_q

    # Looser sanity bound vs the pure-f32 module semantics (covers bf16 operand rounding).
    ref = reference_double_conv(x, w1, g1, b1, w2, g2, b2, quantize_bf16=False)
    err = float(jnp.max(jnp.abs(out - ref)))
    assert jnp.allclose(out, ref, atol=5e-2, rtol=2e-2), err

    print("KERNEL_OK")
</pallas_src>

<mosaic_0001>
module attributes {stable_mosaic.version = 11 : i64} {
  func.func @double_conv_kernel(%arg0: memref<2x16x128xf32, #tpu.memory_space<vmem>>, %arg1: memref<384x128xbf16, #tpu.memory_space<vmem>>, %arg2: memref<384x128xbf16, #tpu.memory_space<vmem>>, %arg3: memref<128x8xf32, #tpu.memory_space<vmem>>, %arg4: memref<8x128xf32, #tpu.memory_space<vmem>>, %arg5: memref<1x8xf32, #tpu.memory_space<vmem>>, %arg6: memref<1x8xf32, #tpu.memory_space<vmem>>, %arg7: memref<1x8xf32, #tpu.memory_space<vmem>>, %arg8: memref<1x8xf32, #tpu.memory_space<vmem>>, %arg9: memref<32x128xf32, #tpu.memory_space<vmem>>, %arg10: memref<2x18x384xbf16, #tpu.memory_space<vmem>>, %arg11: memref<2x18x384xbf16, #tpu.memory_space<vmem>>) attributes {dimension_semantics = [], scalar_prefetch = 0 : i64, scratch_operands = 2 : i64, tpu.core_type = #tpu.core_type<tc>} {
    %c0 = arith.constant 0 : index
    %c0_0 = arith.constant 0 : index
    %c0_1 = arith.constant 0 : index
    %0 = vector.load %arg0[%c0, %c0_0, %c0_1] : memref<2x16x128xf32, #tpu.memory_space<vmem>>, vector<2x16x128xf32>
    %1 = arith.truncf %0 : vector<2x16x128xf32> to vector<2x16x128xbf16>
    %cst = arith.constant 0.000000e+00 : bf16
    %2 = vector.broadcast %cst : bf16 to vector<2x1x128xbf16>
    %c0_2 = arith.constant 0 : index
    %c2 = arith.constant 2 : index
    %c0_3 = arith.constant 0 : index
    %3 = vector.load %arg10[%c0_2, %c2, %c0_3] : memref<2x18x384xbf16, #tpu.memory_space<vmem>>, vector<2x16x128xbf16>
    tpu.vector_store %arg10[%c0_2, %c2, %c0_3], %1 {strides = array<i32>} : memref<2x18x384xbf16, #tpu.memory_space<vmem>>, vector<2x16x128xbf16>,
    %c0_4 = arith.constant 0 : index
    %c1 = arith.constant 1 : index
    %c0_5 = arith.constant 0 : index
    %4 = vector.load %arg10[%c0_4, %c1, %c0_5] : memref<2x18x384xbf16, #tpu.memory_space<vmem>>, vector<2x1x128xbf16>
    tpu.vector_store %arg10[%c0_4, %c1, %c0_5], %2 {strides = array<i32>} : memref<2x18x384xbf16, #tpu.memory_space<vmem>>, vector<2x1x128xbf16>,
    %c0_6 = arith.constant 0 : index
    %c1_7 = arith.constant 1 : index
    %c128 = arith.constant 128 : index
    %5 = vector.load %arg10[%c0_6, %c1_7, %c128] : memref<2x18x384xbf16, #tpu.memory_space<vmem>>, vector<2x16x128xbf16>
    tpu.vector_store %arg10[%c0_6, %c1_7, %c128], %1 {strides = array<i32>} : memref<2x18x384xbf16, #tpu.memory_space<vmem>>, vector<2x16x128xbf16>,
    %c0_8 = arith.constant 0 : index
    %c0_9 = arith.constant 0 : index
    %c256 = arith.constant 256 : index
    %6 = vector.load %arg10[%c0_8, %c0_9, %c256] : memref<2x18x384xbf16, #tpu.memory_space<vmem>>, vector<2x16x128xbf16>
    tpu.vector_store %arg10[%c0_8, %c0_9, %c256], %1 {strides = array<i32>} : memref<2x18x384xbf16, #tpu.memory_space<vmem>>, vector<2x16x128xbf16>,
    %c0_10 = arith.constant 0 : index
    %c16 = arith.constant 16 : index
    %c256_11 = arith.constant 256 : index
    %7 = vector.load %arg10[%c0_10, %c16, %c256_11] : memref<2x18x384xbf16, #tpu.memory_space<vmem>>, vector<2x1x128xbf16>
    tpu.vector_store %arg10[%c0_10, %c16, %c256_11], %2 {strides = array<i32>} : memref<2x18x384xbf16, #tpu.memory_space<vmem>>, vector<2x1x128xbf16>,
    %c0_12 = arith.constant 0 : index
    %c1_13 = arith.constant 1 : index
    %c0_14 = arith.constant 0 : index
    %8 = vector.load %arg10[%c0_12, %c1_13, %c0_14] : memref<2x18x384xbf16, #tpu.memory_space<vmem>>, vector<2x16x384xbf16>
    %9 = vector.shape_cast %8 : vector<2x16x384xbf16> to vector<32x384xbf16>
    %c0_15 = arith.constant 0 : index
    %c0_16 = arith.constant 0 : index
    %10 = vector.load %arg1[%c0_15, %c0_16] : memref<384x128xbf16, #tpu.memory_space<vmem>>, vector<384x128xbf16>
    %cst_17 = arith.constant dense<0.000000e+00> : vector<32x128xf32>
    %11 = tpu.matmul %9, %10, %cst_17 {dimension_numbers = #tpu.dot_dimension_numbers<[1], [0], [0], [1], [0, 0, 1, 1], [], []>} : vector<32x384xbf16>, vector<384x128xbf16>, vector<32x128xf32> -> vector<32x128xf32>
    %cst_18 = arith.constant dense<0.000000e+00> : vector<128xf32>
    %12 = vector.multi_reduction <add>, %11, %cst_18 [0] : vector<32x128xf32> to vector<128xf32>
    %13 = vector.shape_cast %12 : vector<128xf32> to vector<1x128xf32>
    %14 = vector.shape_cast %13 : vector<1x128xf32> to vector<1x128xf32>
    %15 = vector.broadcast %14 : vector<1x128xf32> to vector<8x128xf32>
    %16 = arith.mulf %11, %11 : vector<32x128xf32>
    %cst_19 = arith.constant dense<0.000000e+00> : vector<128xf32>
    %17 = vector.multi_reduction <add>, %16, %cst_19 [0] : vector<32x128xf32> to vector<128xf32>
    %18 = vector.shape_cast %17 : vector<128xf32> to vector<1x128xf32>
    %19 = vector.shape_cast %18 : vector<1x128xf32> to vector<1x128xf32>
    %20 = vector.broadcast %19 : vector<1x128xf32> to vector<8x128xf32>
    %c0_20 = arith.constant 0 : index
    %c0_21 = arith.constant 0 : index
    %21 = vector.load %arg3[%c0_20, %c0_21] : memref<128x8xf32, #tpu.memory_space<vmem>>, vector<128x8xf32>
    %cst_22 = arith.constant dense<0.000000e+00> : vector<8x8xf32>
    %22 = tpu.matmul %15, %21, %cst_22 {dimension_numbers = #tpu.dot_dimension_numbers<[1], [0], [0], [1], [0, 0, 1, 1], [], []>} : vector<8x128xf32>, vector<128x8xf32>, vector<8x8xf32> -> vector<8x8xf32>
    %c0_23 = arith.constant 0 : index
    %c0_24 = arith.constant 0 : index
    %23 = vector.load %arg3[%c0_23, %c0_24] : memref<128x8xf32, #tpu.memory_space<vmem>>, vector<128x8xf32>
    %cst_25 = arith.constant dense<0.000000e+00> : vector<8x8xf32>
    %24 = tpu.matmul %20, %23, %cst_25 {dimension_numbers = #tpu.dot_dimension_numbers<[1], [0], [0], [1], [0, 0, 1, 1], [], []>} : vector<8x128xf32>, vector<128x8xf32>, vector<8x8xf32> -> vector<8x8xf32>
    %cst_26 = arith.constant 0.001953125 : f32
    %25 = vector.broadcast %cst_26 : f32 to vector<8x8xf32>
    %26 = arith.mulf %22, %25 : vector<8x8xf32>
    %cst_27 = arith.constant 0.001953125 : f32
    %27 = vector.broadcast %cst_27 : f32 to vector<8x8xf32>
    %28 = arith.mulf %24, %27 : vector<8x8xf32>
    %29 = arith.mulf %26, %26 : vector<8x8xf32>
    %30 = arith.subf %28, %29 : vector<8x8xf32>
    %cst_28 = arith.constant 0.000000e+00 : f32
    %31 = vector.broadcast %cst_28 : f32 to vector<8x8xf32>
    %32 = arith.maximumf %30, %31 : vector<8x8xf32>
    %c0_29 = arith.constant 0 : index
    %c0_30 = arith.constant 0 : index
    %33 = vector.load %arg5[%c0_29, %c0_30] : memref<1x8xf32, #tpu.memory_space<vmem>>, vector<1x8xf32>
    %cst_31 = arith.constant 9.99999974E-6 : f32
    %34 = vector.broadcast %cst_31 : f32 to vector<8x8xf32>
    %35 = arith.addf %32, %34 : vector<8x8xf32>
    %36 = math.rsqrt %35 : vector<8x8xf32>
    %37 = vector.broadcast %33 : vector<1x8xf32> to vector<8x8xf32>
    %38 = arith.mulf %37, %36 : vector<8x8xf32>
    %c0_32 = arith.constant 0 : index
    %c0_33 = arith.constant 0 : index
    %39 = vector.load %arg6[%c0_32, %c0_33] : memref<1x8xf32, #tpu.memory_space<vmem>>, vector<1x8xf32>
    %40 = arith.mulf %26, %38 : vector<8x8xf32>
    %41 = vector.broadcast %39 : vector<1x8xf32> to vector<8x8xf32>
    %42 = arith.subf %41, %40 : vector<8x8xf32>
    %c0_34 = arith.constant 0 : index
    %c0_35 = arith.constant 0 : index
    %43 = vector.load %arg4[%c0_34, %c0_35] : memref<8x128xf32, #tpu.memory_space<vmem>>, vector<8x128xf32>
    %cst_36 = arith.constant dense<0.000000e+00> : vector<8x128xf32>
    %44 = tpu.matmul %38, %43, %cst_36 {dimension_numbers = #tpu.dot_dimension_numbers<[1], [0], [0], [1], [0, 0, 1, 1], [], []>} : vector<8x8xf32>, vector<8x128xf32>, vector<8x128xf32> -> vector<8x128xf32>
    %45 = vector.extract_strided_slice %44 {offsets = [0, 0], sizes = [1, 128], strides = [1, 1]} : vector<8x128xf32> to vector<1x128xf32>
    %c0_37 = arith.constant 0 : index
    %c0_38 = arith.constant 0 : index
    %46 = vector.load %arg4[%c0_37, %c0_38] : memref<8x128xf32, #tpu.memory_space<vmem>>, vector<8x128xf32>
    %cst_39 = arith.constant dense<0.000000e+00> : vector<8x128xf32>
    %47 = tpu.matmul %42, %46, %cst_39 {dimension_numbers = #tpu.dot_dimension_numbers<[1], [0], [0], [1], [0, 0, 1, 1], [], []>} : vector<8x8xf32>, vector<8x128xf32>, vector<8x128xf32> -> vector<8x128xf32>
    %48 = vector.extract_strided_slice %47 {offsets = [0, 0], sizes = [1, 128], strides = [1, 1]} : vector<8x128xf32> to vector<1x128xf32>
    %49 = vector.broadcast %45 : vector<1x128xf32> to vector<32x128xf32>
    %50 = arith.mulf %11, %49 : vector<32x128xf32>
    %51 = vector.broadcast %48 : vector<1x128xf32> to vector<32x128xf32>
    %52 = arith.addf %50, %51 : vector<32x128xf32>
    %cst_40 = arith.constant 0.000000e+00 : f32
    %53 = vector.broadcast %cst_40 : f32 to vector<32x128xf32>
    %54 = arith.maximumf %52, %53 : vector<32x128xf32>
    %55 = vector.shape_cast %54 : vector<32x128xf32> to vector<2x16x128xf32>
    %56 = arith.truncf %55 : vector<2x16x128xf32> to vector<2x16x128xbf16>
    %cst_41 = arith.constant 0.000000e+00 : bf16
    %57 = vector.broadcast %cst_41 : bf16 to vector<2x1x128xbf16>
    %c0_42 = arith.constant 0 : index
    %c2_43 = arith.constant 2 : index
    %c0_44 = arith.constant 0 : index
    %58 = vector.load %arg11[%c0_42, %c2_43, %c0_44] : memref<2x18x384xbf16, #tpu.memory_space<vmem>>, vector<2x16x128xbf16>
    tpu.vector_store %arg11[%c0_42, %c2_43, %c0_44], %56 {strides = array<i32>} : memref<2x18x384xbf16, #tpu.memory_space<vmem>>, vector<2x16x128xbf16>,
    %c0_45 = arith.constant 0 : index
    %c1_46 = arith.constant 1 : index
    %c0_47 = arith.constant 0 : index
    %59 = vector.load %arg11[%c0_45, %c1_46, %c0_47] : memref<2x18x384xbf16, #tpu.memory_space<vmem>>, vector<2x1x128xbf16>
    tpu.vector_store %arg11[%c0_45, %c1_46, %c0_47], %57 {strides = array<i32>} : memref<2x18x384xbf16, #tpu.memory_space<vmem>>, vector<2x1x128xbf16>,
    %c0_48 = arith.constant 0 : index
    %c1_49 = arith.constant 1 : index
    %c128_50 = arith.constant 128 : index
    %60 = vector.load %arg11[%c0_48, %c1_49, %c128_50] : memref<2x18x384xbf16, #tpu.memory_space<vmem>>, vector<2x16x128xbf16>
    tpu.vector_store %arg11[%c0_48, %c1_49, %c128_50], %56 {strides = array<i32>} : memref<2x18x384xbf16, #tpu.memory_space<vmem>>, vector<2x16x128xbf16>,
    %c0_51 = arith.constant 0 : index
    %c0_52 = arith.constant 0 : index
    %c256_53 = arith.constant 256 : index
    %61 = vector.load %arg11[%c0_51, %c0_52, %c256_53] : memref<2x18x384xbf16, #tpu.memory_space<vmem>>, vector<2x16x128xbf16>
    tpu.vector_store %arg11[%c0_51, %c0_52, %c256_53], %56 {strides = array<i32>} : memref<2x18x384xbf16, #tpu.memory_space<vmem>>, vector<2x16x128xbf16>,
    %c0_54 = arith.constant 0 : index
    %c16_55 = arith.constant 16 : index
    %c256_56 = arith.constant 256 : index
    %62 = vector.load %arg11[%c0_54, %c16_55, %c256_56] : memref<2x18x384xbf16, #tpu.memory_space<vmem>>, vector<2x1x128xbf16>
    tpu.vector_store %arg11[%c0_54, %c16_55, %c256_56], %57 {strides = array<i32>} : memref<2x18x384xbf16, #tpu.memory_space<vmem>>, vector<2x1x128xbf16>,
    %c0_57 = arith.constant 0 : index
    %c1_58 = arith.constant 1 : index
    %c0_59 = arith.constant 0 : index
    %63 = vector.load %arg11[%c0_57, %c1_58, %c0_59] : memref<2x18x384xbf16, #tpu.memory_space<vmem>>, vector<2x16x384xbf16>
    %64 = vector.shape_cast %63 : vector<2x16x384xbf16> to vector<32x384xbf16>
    %c0_60 = arith.constant 0 : index
    %c0_61 = arith.constant 0 : index
    %65 = vector.load %arg2[%c0_60, %c0_61] : memref<384x128xbf16, #tpu.memory_space<vmem>>, vector<384x128xbf16>
    %cst_62 = arith.constant dense<0.000000e+00> : vector<32x128xf32>
    %66 = tpu.matmul %64, %65, %cst_62 {dimension_numbers = #tpu.dot_dimension_numbers<[1], [0], [0], [1], [0, 0, 1, 1], [], []>} : vector<32x384xbf16>, vector<384x128xbf16>, vector<32x128xf32> -> vector<32x128xf32>
    %cst_63 = arith.constant dense<0.000000e+00> : vector<128xf32>
    %67 = vector.multi_reduction <add>, %66, %cst_63 [0] : vector<32x128xf32> to vector<128xf32>
    %68 = vector.shape_cast %67 : vector<128xf32> to vector<1x128xf32>
    %69 = vector.shape_cast %68 : vector<1x128xf32> to vector<1x128xf32>
    %70 = vector.broadcast %69 : vector<1x128xf32> to vector<8x128xf32>
    %71 = arith.mulf %66, %66 : vector<32x128xf32>
    %cst_64 = arith.constant dense<0.000000e+00> : vector<128xf32>
    %72 = vector.multi_reduction <add>, %71, %cst_64 [0] : vector<32x128xf32> to vector<128xf32>
    %73 = vector.shape_cast %72 : vector<128xf32> to vector<1x128xf32>
    %74 = vector.shape_cast %73 : vector<1x128xf32> to vector<1x128xf32>
    %75 = vector.broadcast %74 : vector<1x128xf32> to vector<8x128xf32>
    %c0_65 = arith.constant 0 : index
    %c0_66 = arith.constant 0 : index
    %76 = vector.load %arg3[%c0_65, %c0_66] : memref<128x8xf32, #tpu.memory_space<vmem>>, vector<128x8xf32>
    %cst_67 = arith.constant dense<0.000000e+00> : vector<8x8xf32>
    %77 = tpu.matmul %70, %76, %cst_67 {dimension_numbers = #tpu.dot_dimension_numbers<[1], [0], [0], [1], [0, 0, 1, 1], [], []>} : vector<8x128xf32>, vector<128x8xf32>, vector<8x8xf32> -> vector<8x8xf32>
    %c0_68 = arith.constant 0 : index
    %c0_69 = arith.constant 0 : index
    %78 = vector.load %arg3[%c0_68, %c0_69] : memref<128x8xf32, #tpu.memory_space<vmem>>, vector<128x8xf32>
    %cst_70 = arith.constant dense<0.000000e+00> : vector<8x8xf32>
    %79 = tpu.matmul %75, %78, %cst_70 {dimension_numbers = #tpu.dot_dimension_numbers<[1], [0], [0], [1], [0, 0, 1, 1], [], []>} : vector<8x128xf32>, vector<128x8xf32>, vector<8x8xf32> -> vector<8x8xf32>
    %cst_71 = arith.constant 0.001953125 : f32
    %80 = vector.broadcast %cst_71 : f32 to vector<8x8xf32>
    %81 = arith.mulf %77, %80 : vector<8x8xf32>
    %cst_72 = arith.constant 0.001953125 : f32
    %82 = vector.broadcast %cst_72 : f32 to vector<8x8xf32>
    %83 = arith.mulf %79, %82 : vector<8x8xf32>
    %84 = arith.mulf %81, %81 : vector<8x8xf32>
    %85 = arith.subf %83, %84 : vector<8x8xf32>
    %cst_73 = arith.constant 0.000000e+00 : f32
    %86 = vector.broadcast %cst_73 : f32 to vector<8x8xf32>
    %87 = arith.maximumf %85, %86 : vector<8x8xf32>
    %c0_74 = arith.constant 0 : index
    %c0_75 = arith.constant 0 : index
    %88 = vector.load %arg7[%c0_74, %c0_75] : memref<1x8xf32, #tpu.memory_space<vmem>>, vector<1x8xf32>
    %cst_76 = arith.constant 9.99999974E-6 : f32
    %89 = vector.broadcast %cst_76 : f32 to vector<8x8xf32>
    %90 = arith.addf %87, %89 : vector<8x8xf32>
    %91 = math.rsqrt %90 : vector<8x8xf32>
    %92 = vector.broadcast %88 : vector<1x8xf32> to vector<8x8xf32>
    %93 = arith.mulf %92, %91 : vector<8x8xf32>
    %c0_77 = arith.constant 0 : index
    %c0_78 = arith.constant 0 : index
    %94 = vector.load %arg8[%c0_77, %c0_78] : memref<1x8xf32, #tpu.memory_space<vmem>>, vector<1x8xf32>
    %95 = arith.mulf %81, %93 : vector<8x8xf32>
    %96 = vector.broadcast %94 : vector<1x8xf32> to vector<8x8xf32>
    %97 = arith.subf %96, %95 : vector<8x8xf32>
    %c0_79 = arith.constant 0 : index
    %c0_80 = arith.constant 0 : index
    %98 = vector.load %arg4[%c0_79, %c0_80] : memref<8x128xf32, #tpu.memory_space<vmem>>, vector<8x128xf32>
    %cst_81 = arith.constant dense<0.000000e+00> : vector<8x128xf32>
    %99 = tpu.matmul %93, %98, %cst_81 {dimension_numbers = #tpu.dot_dimension_numbers<[1], [0], [0], [1], [0, 0, 1, 1], [], []>} : vector<8x8xf32>, vector<8x128xf32>, vector<8x128xf32> -> vector<8x128xf32>
    %100 = vector.extract_strided_slice %99 {offsets = [0, 0], sizes = [1, 128], strides = [1, 1]} : vector<8x128xf32> to vector<1x128xf32>
    %c0_82 = arith.constant 0 : index
    %c0_83 = arith.constant 0 : index
    %101 = vector.load %arg4[%c0_82, %c0_83] : memref<8x128xf32, #tpu.memory_space<vmem>>, vector<8x128xf32>
    %cst_84 = arith.constant dense<0.000000e+00> : vector<8x128xf32>
    %102 = tpu.matmul %97, %101, %cst_84 {dimension_numbers = #tpu.dot_dimension_numbers<[1], [0], [0], [1], [0, 0, 1, 1], [], []>} : vector<8x8xf32>, vector<8x128xf32>, vector<8x128xf32> -> vector<8x128xf32>
    %103 = vector.extract_strided_slice %102 {offsets = [0, 0], sizes = [1, 128], strides = [1, 1]} : vector<8x128xf32> to vector<1x128xf32>
    %104 = vector.broadcast %100 : vector<1x128xf32> to vector<32x128xf32>
    %105 = arith.mulf %66, %104 : vector<32x128xf32>
    %106 = vector.broadcast %103 : vector<1x128xf32> to vector<32x128xf32>
    %107 = arith.addf %105, %106 : vector<32x128xf32>
    %cst_85 = arith.constant 0.000000e+00 : f32
    %108 = vector.broadcast %cst_85 : f32 to vector<32x128xf32>
    %109 = arith.maximumf %107, %108 : vector<32x128xf32>
    %c0_86 = arith.constant 0 : index
    %c0_87 = arith.constant 0 : index
    %110 = vector.load %arg9[%c0_86, %c0_87] : memref<32x128xf32, #tpu.memory_space<vmem>>, vector<32x128xf32>
    tpu.vector_store %arg9[%c0_86, %c0_87], %109 {strides = array<i32>} : memref<32x128xf32, #tpu.memory_space<vmem>>, vector<32x128xf32>,
    return
  }
}

</mosaic_0001>

<llo_original>
// kernel: tpu_custom_call.1
$region0: #{tpu_custom_call.1}
  #allocation0 [shape = 'u32[]', space=smem, size = 0x4, offset = 0x4, fixed_abs, tag = 'smem constant byte address 0x4 - core index']
  #allocation1 [shape = 'u32[144,128]{1,0:T(1,128)}', space=vmem, size = 0x12000, scoped, tag = 'internal scratch']
  #allocation2 [shape = 'bf16[2,18,384]{2,1,0:T(8,128)(2,1)}', space=vmem, size = 0x9000, scoped, tag = 'scratch operand']
  #allocation3 [shape = 'bf16[2,18,384]{2,1,0:T(8,128)(2,1)}', space=vmem, size = 0x9000, scoped, tag = 'scratch operand']
  %s0 = inlined_call_operand.vmem [shape: f32[2,16,128], index: 0, kind: input, shape index: {}]
  %s1 = inlined_call_operand.hbm [shape: bf16[384,128], index: 1, kind: input, shape index: {}]
  %s2 = inlined_call_operand.hbm [shape: bf16[384,128], index: 2, kind: input, shape index: {}]
  %s3 = inlined_call_operand.vmem [shape: f32[128,8], index: 3, kind: input, shape index: {}]
  %s4 = inlined_call_operand.vmem [shape: f32[8,128], index: 4, kind: input, shape index: {}]
  %s5 = inlined_call_operand.vmem [shape: f32[1,8], index: 5, kind: input, shape index: {}]
  %s6 = inlined_call_operand.vmem [shape: f32[1,8], index: 6, kind: input, shape index: {}]
  %s7 = inlined_call_operand.vmem [shape: f32[1,8], index: 7, kind: input, shape index: {}]
  %s8 = inlined_call_operand.vmem [shape: f32[1,8], index: 8, kind: input, shape index: {}]
  %s9 = inlined_call_operand.hbm [shape: f32[32,128], index: 9, kind: output, shape index: {}]
  %s10 = sld [smem:[#allocation0]]
  $region54: #{tpu_custom_call.1} parent=0
    _
  %s12 = ssub.s32 1, %s10
  %s13 = scalar_select 0, %s12, %s10
  $region1: #{tpu_custom_call.1} parent=0
    #allocation4 [shape = 'u8[98304]{0}', space=vmem, size = 0x18000, scoped, tag = 'input window, operand 1, single buffered']
    #allocation5 [shape = 's32[1]{0}', space=sflag, size = 0x4, scoped, tag = 'scoped memory for tpu_custom_call.1']
    #allocation6 [shape = 's32[1]{0}', space=sflag, size = 0x4, scoped, tag = 'scoped memory for tpu_custom_call.1']
    #allocation7 [shape = 'u8[98304]{0}', space=vmem, size = 0x18000, scoped, tag = 'input window, operand 2, single buffered']
    #allocation8 [shape = 's32[1]{0}', space=sflag, size = 0x4, scoped, tag = 'scoped memory for tpu_custom_call.1']
    #allocation9 [shape = 'u8[16384]{0}', space=vmem, size = 0x4000, scoped, tag = 'output window, operand 0, single buffered']
    %14 = vsyncpa [#allocation5], 0
    %15 = vsyncpa [#allocation8], 0
    %16 = vsyncpa [#allocation6], 0
    // Predicated region
    $region2: #{tpu_custom_call.1} parent=1 // pred_check
      _
    $region3: #{tpu_custom_call.1} parent=1 // pred_check_branch
      %18 = sbr.rel (0) target = $region5
    $region4: #{tpu_custom_call.1} parent=1 // pred_region
      _
    $region5: #{tpu_custom_call.1} parent=1 // pred_fallthru
      _
    // Predicated region
    $region6: #{tpu_custom_call.1} parent=1 // pred_check
      _
    $region7: #{tpu_custom_call.1} parent=1 // pred_check_branch
      %20 = sbr.rel (0) target = $region9
    $region8: #{tpu_custom_call.1} parent=1 // pred_region
      %s22 = ssub.s32 3072, 3072
      %23 = vsyncadd [#allocation5], %s22
      %s24 = sshll.u32 [#allocation4], 4
      %s25 = int_to_ptr.vmem [resolvable:$true] %s24
      %30 = dma.hbm_to_vmem [thread:$0]  %s1, 3072, %s25, [#allocation5], 64, 64, 4
    $region9: #{tpu_custom_call.1} parent=1 // pred_fallthru
      _
    // Predicated region
    $region10: #{tpu_custom_call.1} parent=1 // pred_check
      _
    $region11: #{tpu_custom_call.1} parent=1 // pred_check_branch
      %32 = sbr.rel (0) target = $region13
    $region12: #{tpu_custom_call.1} parent=1 // pred_region
      %s34 = ssub.s32 3072, 3072
      %35 = vsyncadd [#allocation8], %s34
      %s36 = sshll.u32 [#allocation7], 4
      %s37 = int_to_ptr.vmem [resolvable:$true] %s36
      %42 = dma.hbm_to_vmem [thread:$0]  %s2, 3072, %s37, [#allocation8], 64, 64, 4
    $region13: #{tpu_custom_call.1} parent=1 // pred_fallthru
      _
    // Predicated region
    $region14: #{tpu_custom_call.1} parent=1 // pred_check
      _
    $region15: #{tpu_custom_call.1} parent=1 // pred_check_branch
      %44 = sbr.rel (0) target = $region17
    $region16: #{tpu_custom_call.1} parent=1 // pred_region
      _
    $region17: #{tpu_custom_call.1} parent=1 // pred_fallthru
      _
    // Predicated region
    $region18: #{tpu_custom_call.1} parent=1 // pred_check
      _
    $region19: #{tpu_custom_call.1} parent=1 // pred_check_branch
      %46 = sbr.rel (0) target = $region21
    $region20: #{tpu_custom_call.1} parent=1 // pred_region
      _
    $region21: #{tpu_custom_call.1} parent=1 // pred_fallthru
      _
    // Predicated region
    $region22: #{tpu_custom_call.1} parent=1 // pred_check
      _
    $region23: #{tpu_custom_call.1} parent=1 // pred_check_branch
      %48 = sbr.rel (0) target = $region25
    $region24: #{tpu_custom_call.1} parent=1 // pred_region
      _
    $region25: #{tpu_custom_call.1} parent=1 // pred_fallthru
      _
    // Predicated region
    $region26: #{tpu_custom_call.1} parent=1 // pred_check
      _
    $region27: #{tpu_custom_call.1} parent=1 // pred_check_branch
      %50 = sbr.rel (0) target = $region29
    $region28: #{tpu_custom_call.1} parent=1 // pred_region
      _
    $region29: #{tpu_custom_call.1} parent=1 // pred_fallthru
      _
    // Predicated region
    $region30: #{tpu_custom_call.1} parent=1 // pred_check
      _
    $region31: #{tpu_custom_call.1} parent=1 // pred_check_branch
      %52 = sbr.rel (0) target = $region33
    $region32: #{tpu_custom_call.1} parent=1 // pred_region
      _
    $region33: #{tpu_custom_call.1} parent=1 // pred_fallthru
      _
    // Predicated region
    $region34: #{tpu_custom_call.1} parent=1 // pred_check
      _
    $region35: #{tpu_custom_call.1} parent=1 // pred_check_branch
      %54 = sbr.rel (0) target = $region37
    $region36: #{tpu_custom_call.1} parent=1 // pred_region
      _
    $region37: #{tpu_custom_call.1} parent=1 // pred_fallthru
      _
    // Predicated region
    $region38: #{tpu_custom_call.1} parent=1 // pred_check
      _
    $region39: #{tpu_custom_call.1} parent=1 // pred_check_branch
      %56 = sbr.rel (0) target = $region41
    $region40: #{tpu_custom_call.1} parent=1 // pred_region
      %57 = dma.done [#allocation5], 3072
    $region41: #{tpu_custom_call.1} parent=1 // pred_fallthru
      _
    // Predicated region
    $region42: #{tpu_custom_call.1} parent=1 // pred_check
      _
    $region43: #{tpu_custom_call.1} parent=1 // pred_check_branch
      %59 = sbr.rel (0) target = $region45
    $region44: #{tpu_custom_call.1} parent=1 // pred_region
      %60 = dma.done [#allocation8], 3072
    $region45: #{tpu_custom_call.1} parent=1 // pred_fallthru
      _
    %v62 = vld [vmem:[%s0] sm:$0xff]
    %v63 = vld [vmem:[%s0 + $0x8] sm:$0xff]
    %v64 = vld [vmem:[%s0 + $0x10] sm:$0xff]
    %v65 = vld [vmem:[%s0 + $0x18] sm:$0xff]
    %v66 = vpack.c.bf16 %v63, %v62
    %v67 = vpack.c.bf16 %v65, %v64
    %v70 = vunpack.c.l.b16 %v66
    %v71 = vunpack.c.h.b16 %v66
    %v72 = vunpack.c.l.b16 %v67
    %v73 = vunpack.c.h.b16 %v67
    %v74 = vpack.c.b16 %v70, %v70
    %v75 = vpack.c.b16 %v71, %v71
    %v76 = vpack.c.b16 %v72, %v72
    %v77 = vpack.c.b16 %v73, %v73
    %vm78 = vcmask 1040384
    %vm79 = vcmask 1044484
    %vm80 = vmor %vm78, %vm79
    %v81 = vrot.slane %v74, 7
    %v82 = vrot.slane %v81, 4
    %v83 = vrot.slane %v75, 7
    %v84 = vsel %vm80, %v82, %v83
    %v85 = vrot.slane %v83, 4
    %v86 = vrot.slane %v76, 7
    %v87 = vrot.slane %v86, 4
    %v88 = vrot.slane %v77, 7
    %v89 = vsel %vm80, %v87, %v88
    %v90 = vrot.slane %v88, 4
    %97 = vst [vmem:[#allocation2] sm:$0xe] %v81
    %98 = vst [vmem:[#allocation2 + $0xc] sm:$0xf] %v84
    %99 = vst [vmem:[#allocation2 + $0x18] sm:$0x1] %v85
    %100 = vst [vmem:[#allocation2 + $0x24] sm:$0xe] %v86
    %101 = vst [vmem:[#allocation2 + $0x30] sm:$0xf] %v89
    %102 = vst [vmem:[#allocation2 + $0x3c] sm:$0x1] %v90
    %vm103 = vsmask.f32 7938
    %vm104 = vmand %vm78, %vm103
    %v105 = vld [vmem:[#allocation2] sm:$0x1]
    %v106 = vsel %vm104, 0, %v105
    %107 = vst [vmem:[#allocation2] sm:$0x1] %v106
    %v108 = vld [vmem:[#allocation2 + $0x24] sm:$0x1]
    %v109 = vsel %vm104, 0, %v108
    %110 = vst [vmem:[#allocation2 + $0x24] sm:$0x1] %v109
    %vm111 = vsmask.f32 256
    %vm112 = vsmask.f32 4368
    %vm113 = vmor %vm111, %vm112
    %v115 = vshrl.u32 %v74, 16
    %v117 = vrot.slane %v115, 7
    %v118 = vshll.u32 %v74, 16
    %v120 = vor.u32 %v117, %v118
    %v121 = vrot.slane %v117, 4
    %v123 = vshrl.u32 %v75, 16
    %v125 = vrot.slane %v123, 7
    %v126 = vshll.u32 %v75, 16
    %v128 = vor.u32 %v125, %v126
    %v129 = vsel %vm113, %v121, %v128
    %v130 = vrot.slane %v125, 4
    %v132 = vshrl.u32 %v76, 16
    %v134 = vrot.slane %v132, 7
    %v135 = vshll.u32 %v76, 16
    %v137 = vor.u32 %v134, %v135
    %v138 = vrot.slane %v134, 4
    %v140 = vshrl.u32 %v77, 16
    %v142 = vrot.slane %v140, 7
    %v143 = vshll.u32 %v77, 16
    %v145 = vor.u32 %v142, %v143
    %v146 = vsel %vm113, %v138, %v145
    %v147 = vrot.slane %v142, 4
    %vm154 = vcmask 1043456
    %vm155 = vmand %vm154, %vm103
    %v156 = vld [vmem:[#allocation2 + $0x4] sm:$0xf]
    %v157 = vsel %vm155, %v120, %v156
    %158 = vst [vmem:[#allocation2 + $0x4] sm:$0xf] %v157
    %159 = vst [vmem:[#allocation2 + $0x10] sm:$0xf] %v129
    %vm160 = vmand %vm78, %vm111
    %v161 = vld [vmem:[#allocation2 + $0x1c] sm:$0x1]
    %v162 = vsel %vm160, %v130, %v161
    %163 = vst [vmem:[#allocation2 + $0x1c] sm:$0x1] %v162
    %v164 = vld [vmem:[#allocation2 + $0x28] sm:$0xf]
    %v165 = vsel %vm155, %v137, %v164
    %166 = vst [vmem:[#allocation2 + $0x28] sm:$0xf] %v165
    %167 = vst [vmem:[#allocation2 + $0x34] sm:$0xf] %v146
    %v168 = vld [vmem:[#allocation2 + $0x40] sm:$0x1]
    %v169 = vsel %vm160, %v147, %v168
    %170 = vst [vmem:[#allocation2 + $0x40] sm:$0x1] %v169
    %175 = vst [vmem:[#allocation2 + $0x8] sm:$0xf] %v74
    %176 = vst [vmem:[#allocation2 + $0x14] sm:$0xf] %v75
    %177 = vst [vmem:[#allocation2 + $0x2c] sm:$0xf] %v76
    %178 = vst [vmem:[#allocation2 + $0x38] sm:$0xf] %v77
    %v179 = vld [vmem:[#allocation2 + $0x20] sm:$0x1]
    %v180 = vsel %vm160, 0, %v179
    %181 = vst [vmem:[#allocation2 + $0x20] sm:$0x1] %v180
    %v182 = vld [vmem:[#allocation2 + $0x44] sm:$0x1]
    %v183 = vsel %vm160, 0, %v182
    %184 = vst [vmem:[#allocation2 + $0x44] sm:$0x1] %v183
    %v185 = vld [vmem:[#allocation2] sm:$0xff]
    %v186 = vld [vmem:[#allocation2 + $0x8] sm:$0xf]
    %v187 = vld [vmem:[#allocation2 + $0xc] sm:$0xff]
    %v188 = vld [vmem:[#allocation2 + $0x14] sm:$0xf]
    %v189 = vld [vmem:[#allocation2 + $0x18] sm:$0x11]
    %v190 = vld [vmem:[#allocation2 + $0x20] sm:$0x1]
    %v191 = vld [vmem:[#allocation2 + $0x24] sm:$0xff]
    %v192 = vld [vmem:[#allocation2 + $0x2c] sm:$0xf]
    %v193 = vld [vmem:[#allocation2 + $0x30] sm:$0xff]
    %v194 = vld [vmem:[#allocation2 + $0x38] sm:$0xf]
    %v195 = vld [vmem:[#allocation2 + $0x3c] sm:$0x11]
    %v196 = vld [vmem:[#allocation2 + $0x44] sm:$0x1]
    %vm197 = vsmask.f32 3328
    %vm198 = vsmask.f32 7440
    %vm199 = vmor %vm197, %vm198
    %v201 = vshrl.u32 %v185, 16
    %v203 = vrot.slane %v201, 4
    %v204 = vshll.u32 %v185, 16
    %v206 = vrot.slane %v204, 5
    %v207 = vor.u32 %v203, %v206
    %v208 = vrot.slane %v207, 4
    %v210 = vshll.u32 %v187, 16
    %v212 = vrot.slane %v210, 5
    %v213 = vsel %vm199, %v208, %v212
    %v215 = vshrl.u32 %v186, 16
    %v217 = vrot.slane %v215, 4
    %v218 = vshll.u32 %v186, 16
    %v220 = vrot.slane %v218, 5
    %v221 = vor.u32 %v217, %v220
    %v222 = vrot.slane %v221, 4
    %v224 = vshll.u32 %v188, 16
    %v226 = vrot.slane %v224, 5
    %v227 = vsel %vm199, %v222, %v226
    %v228 = vshrl.u32 %v187, 16
    %v230 = vrot.slane %v228, 4
    %v231 = vor.u32 %v230, %v212
    %v232 = vrot.slane %v231, 4
    %v234 = vshll.u32 %v189, 16
    %v236 = vrot.slane %v234, 5
    %v237 = vsel %vm199, %v232, %v236
    %v238 = vshrl.u32 %v188, 16
    %v240 = vrot.slane %v238, 4
    %v241 = vor.u32 %v240, %v226
    %v242 = vrot.slane %v241, 4
    %v244 = vshll.u32 %v190, 16
    %v246 = vrot.slane %v244, 5
    %v247 = vsel %vm199, %v242, %v246
    %v249 = vshrl.u32 %v191, 16
    %v251 = vrot.slane %v249, 4
    %v252 = vshll.u32 %v191, 16
    %v254 = vrot.slane %v252, 5
    %v255 = vor.u32 %v251, %v254
    %v256 = vrot.slane %v255, 4
    %v258 = vshll.u32 %v193, 16
    %v260 = vrot.slane %v258, 5
    %v261 = vsel %vm199, %v256, %v260
    %v263 = vshrl.u32 %v192, 16
    %v265 = vrot.slane %v263, 4
    %v266 = vshll.u32 %v192, 16
    %v268 = vrot.slane %v266, 5
    %v269 = vor.u32 %v265, %v268
    %v270 = vrot.slane %v269, 4
    %v272 = vshll.u32 %v194, 16
    %v274 = vrot.slane %v272, 5
    %v275 = vsel %vm199, %v270, %v274
    %v276 = vshrl.u32 %v193, 16
    %v278 = vrot.slane %v276, 4
    %v279 = vor.u32 %v278, %v260
    %v280 = vrot.slane %v279, 4
    %v282 = vshll.u32 %v195, 16
    %v284 = vrot.slane %v282, 5
    %v285 = vsel %vm199, %v280, %v284
    %v286 = vshrl.u32 %v194, 16
    %v288 = vrot.slane %v286, 4
    %v289 = vor.u32 %v288, %v274
    %v290 = vrot.slane %v289, 4
    %v292 = vshll.u32 %v196, 16
    %v294 = vrot.slane %v292, 5
    %v295 = vsel %vm199, %v290, %v294
    %v296 = vld [vmem:[#allocation4] sm:$0xf]
    %v297 = vld [vmem:[#allocation4 + $0x4] sm:$0xf]
    %v298 = vld [vmem:[#allocation4 + $0x8] sm:$0xf]
    %v299 = vld [vmem:[#allocation4 + $0xc] sm:$0xf]
    %v300 = vld [vmem:[#allocation4 + $0x10] sm:$0xf]
    %v301 = vld [vmem:[#allocation4 + $0x14] sm:$0xf]
    %v302 = vld [vmem:[#allocation4 + $0x18] sm:$0xf]
    %v303 = vld [vmem:[#allocation4 + $0x1c] sm:$0xf]
    %v304 = vld [vmem:[#allocation4 + $0x20] sm:$0xf]
    %v305 = vld [vmem:[#allocation4 + $0x24] sm:$0xf]
    %v306 = vld [vmem:[#allocation4 + $0x28] sm:$0xf]
    %v307 = vld [vmem:[#allocation4 + $0x2c] sm:$0xf]
    %v308 = vld [vmem:[#allocation4 + $0x30] sm:$0xf]
    %v309 = vld [vmem:[#allocation4 + $0x34] sm:$0xf]
    %v310 = vld [vmem:[#allocation4 + $0x38] sm:$0xf]
    %v311 = vld [vmem:[#allocation4 + $0x3c] sm:$0xf]
    %v312 = vld [vmem:[#allocation4 + $0x40] sm:$0xf]
    %v313 = vld [vmem:[#allocation4 + $0x44] sm:$0xf]
    %v314 = vld [vmem:[#allocation4 + $0x48] sm:$0xf]
    %v315 = vld [vmem:[#allocation4 + $0x4c] sm:$0xf]
    %v316 = vld [vmem:[#allocation4 + $0x50] sm:$0xf]
    %v317 = vld [vmem:[#allocation4 + $0x54] sm:$0xf]
    %v318 = vld [vmem:[#allocation4 + $0x58] sm:$0xf]
    %v319 = vld [vmem:[#allocation4 + $0x5c] sm:$0xf]
    %v320 = vld [vmem:[#allocation4 + $0x60] sm:$0xf]
    %v321 = vld [vmem:[#allocation4 + $0x64] sm:$0xf]
    %v322 = vld [vmem:[#allocation4 + $0x68] sm:$0xf]
    %v323 = vld [vmem:[#allocation4 + $0x6c] sm:$0xf]
    %v324 = vld [vmem:[#allocation4 + $0x70] sm:$0xf]
    %v325 = vld [vmem:[#allocation4 + $0x74] sm:$0xf]
    %v326 = vld [vmem:[#allocation4 + $0x78] sm:$0xf]
    %v327 = vld [vmem:[#allocation4 + $0x7c] sm:$0xf]
    %v328 = vld [vmem:[#allocation4 + $0x80] sm:$0xf]
    %v329 = vld [vmem:[#allocation4 + $0x84] sm:$0xf]
    %v330 = vld [vmem:[#allocation4 + $0x88] sm:$0xf]
    %v331 = vld [vmem:[#allocation4 + $0x8c] sm:$0xf]
    %v332 = vld [vmem:[#allocation4 + $0x90] sm:$0xf]
    %v333 = vld [vmem:[#allocation4 + $0x94] sm:$0xf]
    %v334 = vld [vmem:[#allocation4 + $0x98] sm:$0xf]
    %v335 = vld [vmem:[#allocation4 + $0x9c] sm:$0xf]
    %v336 = vld [vmem:[#allocation4 + $0xa0] sm:$0xf]
    %v337 = vld [vmem:[#allocation4 + $0xa4] sm:$0xf]
    %v338 = vld [vmem:[#allocation4 + $0xa8] sm:$0xf]
    %v339 = vld [vmem:[#allocation4 + $0xac] sm:$0xf]
    %v340 = vld [vmem:[#allocation4 + $0xb0] sm:$0xf]
    %v341 = vld [vmem:[#allocation4 + $0xb4] sm:$0xf]
    %v342 = vld [vmem:[#allocation4 + $0xb8] sm:$0xf]
    %v343 = vld [vmem:[#allocation4 + $0xbc] sm:$0xf]
    %v344 = vunpack.c.l.b16 %v213
    %v345 = vunpack.c.h.b16 %v213
    %v346 = vunpack.c.l.b16 %v227
    %v347 = vunpack.c.l.b16 %v237
    %v348 = vunpack.c.h.b16 %v237
    %v349 = vunpack.c.l.b16 %v247
    %v350 = vunpack.c.l.b16 %v261
    %v351 = vunpack.c.h.b16 %v261
    %v352 = vunpack.c.l.b16 %v275
    %v353 = vunpack.c.l.b16 %v285
    %v354 = vunpack.c.h.b16 %v285
    %v355 = vunpack.c.l.b16 %v295
    %v356 = vpack.c.b16 %v347, %v344
    %v357 = vpack.c.b16 %v348, %v345
    %v358 = vpack.c.b16 %v349, %v346
    %v359 = vpack.c.b16 %v353, %v350
    %v360 = vpack.c.b16 %v354, %v351
    %v361 = vpack.c.b16 %v355, %v352
    %v416 = vunpack.c.l.b16 %v296
    %v417 = vunpack.c.l.b16 %v297
    %v418 = vunpack.c.l.b16 %v298
    %v419 = vunpack.c.l.b16 %v299
    %v420 = vunpack.c.l.b16 %v300
    %v421 = vunpack.c.l.b16 %v301
    %v422 = vunpack.c.l.b16 %v302
    %v423 = vunpack.c.l.b16 %v303
    %v424 = vunpack.c.l.b16 %v304
    %v425 = vunpack.c.l.b16 %v305
    %v426 = vunpack.c.l.b16 %v306
    %v427 = vunpack.c.l.b16 %v307
    %v428 = vunpack.c.l.b16 %v308
    %v429 = vunpack.c.l.b16 %v309
    %v430 = vunpack.c.l.b16 %v310
    %v431 = vunpack.c.l.b16 %v311
    %v432 = vunpack.c.l.b16 %v312
    %v433 = vunpack.c.l.b16 %v313
    %v434 = vunpack.c.l.b16 %v314
    %v435 = vunpack.c.l.b16 %v315
    %v436 = vunpack.c.l.b16 %v316
    %v437 = vunpack.c.l.b16 %v317
    %v438 = vunpack.c.l.b16 %v318
    %v439 = vunpack.c.l.b16 %v319
    %v440 = vunpack.c.l.b16 %v320
    %v441 = vunpack.c.l.b16 %v321
    %v442 = vunpack.c.l.b16 %v322
    %v443 = vunpack.c.l.b16 %v323
    %v444 = vunpack.c.l.b16 %v324
    %v445 = vunpack.c.l.b16 %v325
    %v446 = vunpack.c.l.b16 %v326
    %v447 = vunpack.c.l.b16 %v327
    %v448 = vunpack.c.l.b16 %v328
    %v449 = vunpack.c.l.b16 %v329
    %v450 = vunpack.c.l.b16 %v330
    %v451 = vunpack.c.l.b16 %v331
    %v452 = vunpack.c.l.b16 %v332
    %v453 = vunpack.c.l.b16 %v333
    %v454 = vunpack.c.l.b16 %v334
    %v455 = vunpack.c.l.b16 %v335
    %v456 = vunpack.c.l.b16 %v336
    %v457 = vunpack.c.l.b16 %v337
    %v458 = vunpack.c.l.b16 %v338
    %v459 = vunpack.c.l.b16 %v339
    %v460 = vunpack.c.l.b16 %v340
    %v461 = vunpack.c.l.b16 %v341
    %v462 = vunpack.c.l.b16 %v342
    %v463 = vunpack.c.l.b16 %v343
    %v464 = vpack.c.b16 %v417, %v416
    %v465 = vpack.c.b16 %v419, %v418
    %v466 = vpack.c.b16 %v421, %v420
    %v467 = vpack.c.b16 %v423, %v422
    %v468 = vpack.c.b16 %v425, %v424
    %v469 = vpack.c.b16 %v427, %v426
    %v470 = vpack.c.b16 %v429, %v428
    %v471 = vpack.c.b16 %v431, %v430
    %v472 = vpack.c.b16 %v433, %v432
    %v473 = vpack.c.b16 %v435, %v434
    %v474 = vpack.c.b16 %v437, %v436
    %v475 = vpack.c.b16 %v439, %v438
    %v476 = vpack.c.b16 %v441, %v440
    %v477 = vpack.c.b16 %v443, %v442
    %v478 = vpack.c.b16 %v445, %v444
    %v479 = vpack.c.b16 %v447, %v446
    %v480 = vpack.c.b16 %v449, %v448
    %v481 = vpack.c.b16 %v451, %v450
    %v482 = vpack.c.b16 %v453, %v452
    %v483 = vpack.c.b16 %v455, %v454
    %v484 = vpack.c.b16 %v457, %v456
    %v485 = vpack.c.b16 %v459, %v458
    %v486 = vpack.c.b16 %v461, %v460
    %v487 = vpack.c.b16 %v463, %v462
    %512 = vmatprep.subr.bf16.mxu0 0
    %513 = vmatpush1.bf16.msra.mxu0 %v471
    %514 = vmatprep.subr.bf16.mxu0 0
    %515 = vmatpush1.bf16.msra.mxu0 %v470
    %516 = vmatprep.subr.bf16.mxu0 0
    %517 = vmatpush1.bf16.msra.mxu0 %v469
    %518 = vmatprep.subr.bf16.mxu0 0
    %519 = vmatpush1.bf16.msra.mxu0 %v468
    %520 = vmatprep.subr.bf16.mxu0 0
    %521 = vmatpush1.bf16.msra.mxu0 %v467
    %522 = vmatprep.subr.bf16.mxu0 0
    %523 = vmatpush1.bf16.msra.mxu0 %v466
    %524 = vmatprep.subr.bf16.mxu0 0
    %525 = vmatpush1.bf16.msra.mxu0 %v465
    %526 = vmatprep.subr.bf16.mxu0 0
    %527 = vmatpush1.bf16.msra.mxu0 %v464
    %528 = vmatprep.subr.bf16.mxu0 0
    %529 = vmatpush2.bf16.msra.mxu0 %v479
    %530 = vmatprep.subr.bf16.mxu0 0
    %531 = vmatpush2.bf16.msra.mxu0 %v478
    %532 = vmatprep.subr.bf16.mxu0 0
    %533 = vmatpush2.bf16.msra.mxu0 %v477
    %534 = vmatprep.subr.bf16.mxu0 0
    %535 = vmatpush2.bf16.msra.mxu0 %v476
    %536 = vmatprep.subr.bf16.mxu0 0
    %537 = vmatpush2.bf16.msra.mxu0 %v475
    %538 = vmatprep.subr.bf16.mxu0 0
    %539 = vmatpush2.bf16.msra.mxu0 %v474
    %540 = vmatprep.subr.bf16.mxu0 0
    %541 = vmatpush2.bf16.msra.mxu0 %v473
    %542 = vmatprep.subr.bf16.mxu0 0
    %543 = vmatpush2.bf16.msra.mxu0 %v472
    %544 = vmatprep.mubr.bf16.mxu0 %v357
    %545 = vmatmul.mubr.bf16.gmra.mxu0 %v356
    %v546 = vpop.f32.mrf.mxu0
    %v547 = vadd.f32 0.0, %v546
    %v548 = vpop.f32.mrf.mxu0
    %v549 = vpop.f32.mrf.mxu0
    %v550 = vadd.f32 0.0, %v549
    %v551 = vpop.f32.mrf.mxu0
    %552 = vmatprep.mubr.bf16.mxu0 %v360
    %553 = vmatmul.mubr.bf16.gmra.mxu0 %v359
    %v554 = vpop.f32.mrf.mxu0
    %v555 = vadd.f32 0.0, %v554
    %v556 = vpop.f32.mrf.mxu0
    %v557 = vpop.f32.mrf.mxu0
    %v558 = vadd.f32 0.0, %v557
    %v559 = vpop.f32.mrf.mxu0
    %560 = vdwg.mxu0
    %561 = vmatprep.subr.bf16.mxu0 0
    %562 = vmatpush1.bf16.msra.mxu0 %v487
    %563 = vmatprep.subr.bf16.mxu0 0
    %564 = vmatpush1.bf16.msra.mxu0 %v486
    %565 = vmatprep.subr.bf16.mxu0 0
    %566 = vmatpush1.bf16.msra.mxu0 %v485
    %567 = vmatprep.subr.bf16.mxu0 0
    %568 = vmatpush1.bf16.msra.mxu0 %v484
    %569 = vmatprep.subr.bf16.mxu0 0
    %570 = vmatpush1.bf16.msra.mxu0 %v483
    %571 = vmatprep.subr.bf16.mxu0 0
    %572 = vmatpush1.bf16.msra.mxu0 %v482
    %573 = vmatprep.subr.bf16.mxu0 0
    %574 = vmatpush1.bf16.msra.mxu0 %v481
    %575 = vmatprep.subr.bf16.mxu0 0
    %576 = vmatpush1.bf16.msra.mxu0 %v480
    %577 = vmatprep.subr.bf16.mxu0 0
    %578 = vmatpush2.bf16.msra.mxu0 0
    %579 = vmatprep.subr.bf16.mxu0 0
    %580 = vmatpush2.bf16.msra.mxu0 0
    %581 = vmatprep.subr.bf16.mxu0 0
    %582 = vmatpush2.bf16.msra.mxu0 0
    %583 = vmatprep.subr.bf16.mxu0 0
    %584 = vmatpush2.bf16.msra.mxu0 0
    %585 = vmatprep.subr.bf16.mxu0 0
    %586 = vmatpush2.bf16.msra.mxu0 0
    %587 = vmatprep.subr.bf16.mxu0 0
    %588 = vmatpush2.bf16.msra.mxu0 0
    %589 = vmatprep.subr.bf16.mxu0 0
    %590 = vmatpush2.bf16.msra.mxu0 0
    %591 = vmatprep.subr.bf16.mxu0 0
    %592 = vmatpush2.bf16.msra.mxu0 0
    %593 = vmatprep.mubr.bf16.mxu0 0
    %594 = vmatmul.mubr.bf16.gmra.mxu0 %v358
    %v595 = vpop.f32.mrf.mxu0
    %v596 = vadd.f32 %v547, %v595
    %v597 = vpop.f32.mrf.mxu0
    %v598 = vpop.f32.mrf.mxu0
    %v599 = vadd.f32 %v550, %v598
    %v600 = vpop.f32.mrf.mxu0
    %601 = vmatprep.mubr.bf16.mxu0 0
    %602 = vmatmul.mubr.bf16.gmra.mxu0 %v361
    %v603 = vpop.f32.mrf.mxu0
    %v604 = vadd.f32 %v555, %v603
    %v605 = vpop.f32.mrf.mxu0
    %v606 = vpop.f32.mrf.mxu0
    %v607 = vadd.f32 %v558, %v606
    %v608 = vpop.f32.mrf.mxu0
    %609 = vdwg.mxu0
    %v610 = vadd.f32 %v596, %v599
    %v611 = vadd.f32 %v610, %v604
    %v612 = vadd.f32 %v611, %v607
    %v613 = vrot.slane %v612, 4
    %v614 = vadd.f32 %v612, %v613
    %v615 = vrot.slane %v614, 2
    %v616 = vadd.f32 %v614, %v615
    %v617 = vrot.slane %v616, 1
    %v618 = vadd.f32 %v616, %v617
    %v619 = vmul.f32 %v596, %v596
    %v620 = vmul.f32 %v599, %v599
    %v621 = vmul.f32 %v604, %v604
    %v622 = vmul.f32 %v607, %v607
    %v623 = vadd.f32 %v619, %v620
    %v624 = vadd.f32 %v623, %v621
    %v625 = vadd.f32 %v624, %v622
    %v626 = vrot.slane %v625, 4
    %v627 = vadd.f32 %v625, %v626
    %v628 = vrot.slane %v627, 2
    %v629 = vadd.f32 %v627, %v628
    %v630 = vrot.slane %v629, 1
    %v631 = vadd.f32 %v629, %v630
    %v632 = vld [vmem:[%s3] sm:$0xff]
    %v633 = vld [vmem:[%s3 + $0x8] sm:$0xff]
    %v634 = vld [vmem:[%s3 + $0x10] sm:$0xff]
    %v635 = vld [vmem:[%s3 + $0x18] sm:$0xff]
    %v636 = vld [vmem:[%s3 + $0x20] sm:$0xff]
    %v637 = vld [vmem:[%s3 + $0x28] sm:$0xff]
    %v638 = vld [vmem:[%s3 + $0x30] sm:$0xff]
    %v639 = vld [vmem:[%s3 + $0x38] sm:$0xff]
    %v640 = vld [vmem:[%s3 + $0x40] sm:$0xff]
    %v641 = vld [vmem:[%s3 + $0x48] sm:$0xff]
    %v642 = vld [vmem:[%s3 + $0x50] sm:$0xff]
    %v643 = vld [vmem:[%s3 + $0x58] sm:$0xff]
    %v644 = vld [vmem:[%s3 + $0x60] sm:$0xff]
    %v645 = vld [vmem:[%s3 + $0x68] sm:$0xff]
    %v646 = vld [vmem:[%s3 + $0x70] sm:$0xff]
    %v647 = vld [vmem:[%s3 + $0x78] sm:$0xff]
    %648 = vmatprep.subr.mxu0 0.0
    %649 = vmatpush1.msra.mxu0 %v647
    %650 = vmatprep.subr.mxu0 0.0
    %651 = vmatpush1.msra.mxu0 %v646
    %652 = vmatprep.subr.mxu0 0.0
    %653 = vmatpush1.msra.mxu0 %v645
    %654 = vmatprep.subr.mxu0 0.0
    %655 = vmatpush1.msra.mxu0 %v644
    %656 = vmatprep.subr.mxu0 0.0
    %657 = vmatpush1.msra.mxu0 %v643
    %658 = vmatprep.subr.mxu0 0.0
    %659 = vmatpush1.msra.mxu0 %v642
    %660 = vmatprep.subr.mxu0 0.0
    %661 = vmatpush1.msra.mxu0 %v641
    %662 = vmatprep.subr.mxu0 0.0
    %663 = vmatpush1.msra.mxu0 %v640
    %664 = vmatprep.subr.mxu0 0.0
    %665 = vmatpush1.msra.mxu0 %v639
    %666 = vmatprep.subr.mxu0 0.0
    %667 = vmatpush1.msra.mxu0 %v638
    %668 = vmatprep.subr.mxu0 0.0
    %669 = vmatpush1.msra.mxu0 %v637
    %670 = vmatprep.subr.mxu0 0.0
    %671 = vmatpush1.msra.mxu0 %v636
    %672 = vmatprep.subr.mxu0 0.0
    %673 = vmatpush1.msra.mxu0 %v635
    %674 = vmatprep.subr.mxu0 0.0
    %675 = vmatpush1.msra.mxu0 %v634
    %676 = vmatprep.subr.mxu0 0.0
    %677 = vmatpush1.msra.mxu0 %v633
    %678 = vmatprep.subr.mxu0 0.0
    %679 = vmatpush1.msra.mxu0 %v632
    %680 = vmatprep.subr.mxu0 0.0
    %681 = vmatpush2.msra.mxu0 0.0
    %682 = vmatprep.subr.mxu0 0.0
    %683 = vmatpush2.msra.mxu0 0.0
    %684 = vmatprep.subr.mxu0 0.0
    %685 = vmatpush2.msra.mxu0 0.0
    %686 = vmatprep.subr.mxu0 0.0
    %687 = vmatpush2.msra.mxu0 0.0
    %688 = vmatprep.subr.mxu0 0.0
    %689 = vmatpush2.msra.mxu0 0.0
    %690 = vmatprep.subr.mxu0 0.0
    %691 = vmatpush2.msra.mxu0 0.0
    %692 = vmatprep.subr.mxu0 0.0
    %693 = vmatpush2.msra.mxu0 0.0
    %694 = vmatprep.subr.mxu0 0.0
    %695 = vmatpush2.msra.mxu0 0.0
    %696 = vmatprep.subr.mxu0 0.0
    %697 = vmatpush2.msra.mxu0 0.0
    %698 = vmatprep.subr.mxu0 0.0
    %699 = vmatpush2.msra.mxu0 0.0
    %700 = vmatprep.subr.mxu0 0.0
    %701 = vmatpush2.msra.mxu0 0.0
    %702 = vmatprep.subr.mxu0 0.0
    %703 = vmatpush2.msra.mxu0 0.0
    %704 = vmatprep.subr.mxu0 0.0
    %705 = vmatpush2.msra.mxu0 0.0
    %706 = vmatprep.subr.mxu0 0.0
    %707 = vmatpush2.msra.mxu0 0.0
    %708 = vmatprep.subr.mxu0 0.0
    %709 = vmatpush2.msra.mxu0 0.0
    %710 = vmatprep.subr.mxu0 0.0
    %711 = vmatpush2.msra.mxu0 0.0
    %712 = vmatprep.mubr.f32.mxu0 0.0
    %713 = vmatmul.mubr.f32.gmra.mxu0 %v618
    %v714 = vpop.f32.mrf.mxu0
    %v715 = vadd.f32 0.0, %v714
    %v716 = vpop.f32.mrf.mxu0
    %717 = vdwg.mxu0
    %718 = vmatprep.subr.mxu0 0.0
    %719 = vmatpush1.msra.mxu0 %v647
    %720 = vmatprep.subr.mxu0 0.0
    %721 = vmatpush1.msra.mxu0 %v646
    %722 = vmatprep.subr.mxu0 0.0
    %723 = vmatpush1.msra.mxu0 %v645
    %724 = vmatprep.subr.mxu0 0.0
    %725 = vmatpush1.msra.mxu0 %v644
    %726 = vmatprep.subr.mxu0 0.0
    %727 = vmatpush1.msra.mxu0 %v643
    %728 = vmatprep.subr.mxu0 0.0
    %729 = vmatpush1.msra.mxu0 %v642
    %730 = vmatprep.subr.mxu0 0.0
    %731 = vmatpush1.msra.mxu0 %v641
    %732 = vmatprep.subr.mxu0 0.0
    %733 = vmatpush1.msra.mxu0 %v640
    %734 = vmatprep.subr.mxu0 0.0
    %735 = vmatpush1.msra.mxu0 %v639
    %736 = vmatprep.subr.mxu0 0.0
    %737 = vmatpush1.msra.mxu0 %v638
    %738 = vmatprep.subr.mxu0 0.0
    %739 = vmatpush1.msra.mxu0 %v637
    %740 = vmatprep.subr.mxu0 0.0
    %741 = vmatpush1.msra.mxu0 %v636
    %742 = vmatprep.subr.mxu0 0.0
    %743 = vmatpush1.msra.mxu0 %v635
    %744 = vmatprep.subr.mxu0 0.0
    %745 = vmatpush1.msra.mxu0 %v634
    %746 = vmatprep.subr.mxu0 0.0
    %747 = vmatpush1.msra.mxu0 %v633
    %748 = vmatprep.subr.mxu0 0.0
    %749 = vmatpush1.msra.mxu0 %v632
    %750 = vmatprep.subr.mxu0 0.0
    %751 = vmatpush2.msra.mxu0 0.0
    %752 = vmatprep.subr.mxu0 0.0
    %753 = vmatpush2.msra.mxu0 0.0
    %754 = vmatprep.subr.mxu0 0.0
    %755 = vmatpush2.msra.mxu0 0.0
    %756 = vmatprep.subr.mxu0 0.0
    %757 = vmatpush2.msra.mxu0 0.0
    %758 = vmatprep.subr.mxu0 0.0
    %759 = vmatpush2.msra.mxu0 0.0
    %760 = vmatprep.subr.mxu0 0.0
    %761 = vmatpush2.msra.mxu0 0.0
    %762 = vmatprep.subr.mxu0 0.0
    %763 = vmatpush2.msra.mxu0 0.0
    %764 = vmatprep.subr.mxu0 0.0
    %765 = vmatpush2.msra.mxu0 0.0
    %766 = vmatprep.subr.mxu0 0.0
    %767 = vmatpush2.msra.mxu0 0.0
    %768 = vmatprep.subr.mxu0 0.0
    %769 = vmatpush2.msra.mxu0 0.0
    %770 = vmatprep.subr.mxu0 0.0
    %771 = vmatpush2.msra.mxu0 0.0
    %772 = vmatprep.subr.mxu0 0.0
    %773 = vmatpush2.msra.mxu0 0.0
    %774 = vmatprep.subr.mxu0 0.0
    %775 = vmatpush2.msra.mxu0 0.0
    %776 = vmatprep.subr.mxu0 0.0
    %777 = vmatpush2.msra.mxu0 0.0
    %778 = vmatprep.subr.mxu0 0.0
    %779 = vmatpush2.msra.mxu0 0.0
    %780 = vmatprep.subr.mxu0 0.0
    %781 = vmatpush2.msra.mxu0 0.0
    %782 = vmatprep.mubr.f32.mxu0 0.0
    %783 = vmatmul.mubr.f32.gmra.mxu0 %v631
    %v784 = vpop.f32.mrf.mxu0
    %v785 = vadd.f32 0.0, %v784
    %v786 = vpop.f32.mrf.mxu0
    %787 = vdwg.mxu0
    %v788 = vmul.f32 %v715, 0.001953125
    %v789 = vmul.f32 %v785, 0.001953125
    %v790 = vmul.f32 %v788, %v788
    %v791 = vsub.f32 %v789, %v790
    %v792 = vmax.f32 %v791, 0.0
    %v793 = vld [vmem:[%s5] sm:$0x1]
    %v794 = vadd.f32 %v792, 1e-05
    %v795 = vrsqrt.pop %v794
    %v797 = vlaneseq
    %v798 = vshrl.u32 %v797, 7
    %v799 = vsub.s32 0, %v798
    %v800 = vrot.slane %v793, %v799
    %v802 = vmul.f32 %v800, %v795
    %v803 = vld [vmem:[%s6] sm:$0x1]
    %v804 = vmul.f32 %v788, %v802
    %v806 = vlaneseq
    %v807 = vshrl.u32 %v806, 7
    %v808 = vsub.s32 0, %v807
    %v809 = vrot.slane %v803, %v808
    %v811 = vsub.f32 %v809, %v804
    %v812 = vld [vmem:[%s4] sm:$0xff]
    %vm813 = vcmask 64512
    %v815 = vsel %vm813, %v802, 0
    %817 = vmatprep.subr.mxu0 0.0
    %818 = vmatpush1.msra.mxu0 0.0
    %819 = vmatprep.subr.mxu0 0.0
    %820 = vmatpush1.msra.mxu0 0.0
    %821 = vmatprep.subr.mxu0 0.0
    %822 = vmatpush1.msra.mxu0 0.0
    %823 = vmatprep.subr.mxu0 0.0
    %824 = vmatpush1.msra.mxu0 0.0
    %825 = vmatprep.subr.mxu0 0.0
    %826 = vmatpush1.msra.mxu0 0.0
    %827 = vmatprep.subr.mxu0 0.0
    %828 = vmatpush1.msra.mxu0 0.0
    %829 = vmatprep.subr.mxu0 0.0
    %830 = vmatpush1.msra.mxu0 0.0
    %831 = vmatprep.subr.mxu0 0.0
    %832 = vmatpush1.msra.mxu0 0.0
    %833 = vmatprep.subr.mxu0 0.0
    %834 = vmatpush1.msra.mxu0 0.0
    %835 = vmatprep.subr.mxu0 0.0
    %836 = vmatpush1.msra.mxu0 0.0
    %837 = vmatprep.subr.mxu0 0.0
    %838 = vmatpush1.msra.mxu0 0.0
    %839 = vmatprep.subr.mxu0 0.0
    %840 = vmatpush1.msra.mxu0 0.0
    %841 = vmatprep.subr.mxu0 0.0
    %842 = vmatpush1.msra.mxu0 0.0
    %843 = vmatprep.subr.mxu0 0.0
    %844 = vmatpush1.msra.mxu0 0.0
    %845 = vmatprep.subr.mxu0 0.0
    %846 = vmatpush1.msra.mxu0 0.0
    %847 = vmatprep.subr.mxu0 0.0
    %848 = vmatpush1.msra.mxu0 %v812
    %849 = vmatprep.subr.mxu0 0.0
    %850 = vmatpush2.msra.mxu0 0.0
    %851 = vmatprep.subr.mxu0 0.0
    %852 = vmatpush2.msra.mxu0 0.0
    %853 = vmatprep.subr.mxu0 0.0
    %854 = vmatpush2.msra.mxu0 0.0
    %855 = vmatprep.subr.mxu0 0.0
    %856 = vmatpush2.msra.mxu0 0.0
    %857 = vmatprep.subr.mxu0 0.0
    %858 = vmatpush2.msra.mxu0 0.0
    %859 = vmatprep.subr.mxu0 0.0
    %860 = vmatpush2.msra.mxu0 0.0
    %861 = vmatprep.subr.mxu0 0.0
    %862 = vmatpush2.msra.mxu0 0.0
    %863 = vmatprep.subr.mxu0 0.0
    %864 = vmatpush2.msra.mxu0 0.0
    %865 = vmatprep.subr.mxu0 0.0
    %866 = vmatpush2.msra.mxu0 0.0
    %867 = vmatprep.subr.mxu0 0.0
    %868 = vmatpush2.msra.mxu0 0.0
    %869 = vmatprep.subr.mxu0 0.0
    %870 = vmatpush2.msra.mxu0 0.0
    %871 = vmatprep.subr.mxu0 0.0
    %872 = vmatpush2.msra.mxu0 0.0
    %873 = vmatprep.subr.mxu0 0.0
    %874 = vmatpush2.msra.mxu0 0.0
    %875 = vmatprep.subr.mxu0 0.0
    %876 = vmatpush2.msra.mxu0 0.0
    %877 = vmatprep.subr.mxu0 0.0
    %878 = vmatpush2.msra.mxu0 0.0
    %879 = vmatprep.subr.mxu0 0.0
    %880 = vmatpush2.msra.mxu0 0.0
    %881 = vmatprep.mubr.f32.mxu0 0.0
    %882 = vmatmul.mubr.f32.gmra.mxu0 %v815
    %v883 = vpop.f32.mrf.mxu0
    %v884 = vadd.f32 0.0, %v883
    %v885 = vpop.f32.mrf.mxu0
    %886 = vdwg.mxu0
    %v888 = vsel %vm813, %v811, 0
    %890 = vmatprep.subr.mxu0 0.0
    %891 = vmatpush1.msra.mxu0 0.0
    %892 = vmatprep.subr.mxu0 0.0
    %893 = vmatpush1.msra.mxu0 0.0
    %894 = vmatprep.subr.mxu0 0.0
    %895 = vmatpush1.msra.mxu0 0.0
    %896 = vmatprep.subr.mxu0 0.0
    %897 = vmatpush1.msra.mxu0 0.0
    %898 = vmatprep.subr.mxu0 0.0
    %899 = vmatpush1.msra.mxu0 0.0
    %900 = vmatprep.subr.mxu0 0.0
    %901 = vmatpush1.msra.mxu0 0.0
    %902 = vmatprep.subr.mxu0 0.0
    %903 = vmatpush1.msra.mxu0 0.0
    %904 = vmatprep.subr.mxu0 0.0
    %905 = vmatpush1.msra.mxu0 0.0
    %906 = vmatprep.subr.mxu0 0.0
    %907 = vmatpush1.msra.mxu0 0.0
    %908 = vmatprep.subr.mxu0 0.0
    %909 = vmatpush1.msra.mxu0 0.0
    %910 = vmatprep.subr.mxu0 0.0
    %911 = vmatpush1.msra.mxu0 0.0
    %912 = vmatprep.subr.mxu0 0.0
    %913 = vmatpush1.msra.mxu0 0.0
    %914 = vmatprep.subr.mxu0 0.0
    %915 = vmatpush1.msra.mxu0 0.0
    %916 = vmatprep.subr.mxu0 0.0
    %917 = vmatpush1.msra.mxu0 0.0
    %918 = vmatprep.subr.mxu0 0.0
    %919 = vmatpush1.msra.mxu0 0.0
    %920 = vmatprep.subr.mxu0 0.0
    %921 = vmatpush1.msra.mxu0 %v812
    %922 = vmatprep.subr.mxu0 0.0
    %923 = vmatpush2.msra.mxu0 0.0
    %924 = vmatprep.subr.mxu0 0.0
    %925 = vmatpush2.msra.mxu0 0.0
    %926 = vmatprep.subr.mxu0 0.0
    %927 = vmatpush2.msra.mxu0 0.0
    %928 = vmatprep.subr.mxu0 0.0
    %929 = vmatpush2.msra.mxu0 0.0
    %930 = vmatprep.subr.mxu0 0.0
    %931 = vmatpush2.msra.mxu0 0.0
    %932 = vmatprep.subr.mxu0 0.0
    %933 = vmatpush2.msra.mxu0 0.0
    %934 = vmatprep.subr.mxu0 0.0
    %935 = vmatpush2.msra.mxu0 0.0
    %936 = vmatprep.subr.mxu0 0.0
    %937 = vmatpush2.msra.mxu0 0.0
    %938 = vmatprep.subr.mxu0 0.0
    %939 = vmatpush2.msra.mxu0 0.0
    %940 = vmatprep.subr.mxu0 0.0
    %941 = vmatpush2.msra.mxu0 0.0
    %942 = vmatprep.subr.mxu0 0.0
    %943 = vmatpush2.msra.mxu0 0.0
    %944 = vmatprep.subr.mxu0 0.0
    %945 = vmatpush2.msra.mxu0 0.0
    %946 = vmatprep.subr.mxu0 0.0
    %947 = vmatpush2.msra.mxu0 0.0
    %948 = vmatprep.subr.mxu0 0.0
    %949 = vmatpush2.msra.mxu0 0.0
    %950 = vmatprep.subr.mxu0 0.0
    %951 = vmatpush2.msra.mxu0 0.0
    %952 = vmatprep.subr.mxu0 0.0
    %953 = vmatpush2.msra.mxu0 0.0
    %954 = vmatprep.mubr.f32.mxu0 0.0
    %955 = vmatmul.mubr.f32.gmra.mxu0 %v888
    %v956 = vpop.f32.mrf.mxu0
    %v957 = vadd.f32 0.0, %v956
    %v958 = vpop.f32.mrf.mxu0
    %959 = vdwg.mxu0
    %v960 = vlaneseq
    %v961 = vshrl.u32 %v960, 7
    %v962 = vsub.s32 0, %v961
    %v963 = vrot.slane %v884, %v962
    %v964 = vmul.f32 %v596, %v963
    %v965 = vmul.f32 %v599, %v963
    %v966 = vmul.f32 %v604, %v963
    %v967 = vmul.f32 %v607, %v963
    %v968 = vlaneseq
    %v969 = vshrl.u32 %v968, 7
    %v970 = vsub.s32 0, %v969
    %v971 = vrot.slane %v957, %v970
    %v972 = vadd.f32 %v964, %v971
    %v973 = vadd.f32 %v965, %v971
    %v974 = vadd.f32 %v966, %v971
    %v975 = vadd.f32 %v967, %v971
    %v976 = vmax.f32 %v972, 0.0
    %v977 = vmax.f32 %v973, 0.0
    %v978 = vmax.f32 %v974, 0.0
    %v979 = vmax.f32 %v975, 0.0
    %v980 = vpack.c.bf16 %v977, %v976
    %v981 = vpack.c.bf16 %v979, %v978
    %v984 = vunpack.c.l.b16 %v980
    %v985 = vunpack.c.h.b16 %v980
    %v986 = vunpack.c.l.b16 %v981
    %v987 = vunpack.c.h.b16 %v981
    %v988 = vpack.c.b16 %v984, %v984
    %v989 = vpack.c.b16 %v985, %v985
    %v990 = vpack.c.b16 %v986, %v986
    %v991 = vpack.c.b16 %v987, %v987
    %v992 = vrot.slane %v988, 7
    %v993 = vrot.slane %v992, 4
    %v994 = vrot.slane %v989, 7
    %v995 = vsel %vm80, %v993, %v994
    %v996 = vrot.slane %v994, 4
    %v997 = vrot.slane %v990, 7
    %v998 = vrot.slane %v997, 4
    %v999 = vrot.slane %v991, 7
    %v1000 = vsel %vm80, %v998, %v999
    %v1001 = vrot.slane %v999, 4
    %1008 = vst [vmem:[#allocation3] sm:$0xe] %v992
    %1009 = vst [vmem:[#allocation3 + $0xc] sm:$0xf] %v995
    %1010 = vst [vmem:[#allocation3 + $0x18] sm:$0x1] %v996
    %1011 = vst [vmem:[#allocation3 + $0x24] sm:$0xe] %v997
    %1012 = vst [vmem:[#allocation3 + $0x30] sm:$0xf] %v1000
    %1013 = vst [vmem:[#allocation3 + $0x3c] sm:$0x1] %v1001
    %v1014 = vld [vmem:[#allocation3] sm:$0x1]
    %v1015 = vsel %vm104, 0, %v1014
    %1016 = vst [vmem:[#allocation3] sm:$0x1] %v1015
    %v1017 = vld [vmem:[#allocation3 + $0x24] sm:$0x1]
    %v1018 = vsel %vm104, 0, %v1017
    %1019 = vst [vmem:[#allocation3 + $0x24] sm:$0x1] %v1018
    %v1021 = vshrl.u32 %v988, 16
    %v1023 = vrot.slane %v1021, 7
    %v1024 = vshll.u32 %v988, 16
    %v1026 = vor.u32 %v1023, %v1024
    %v1027 = vrot.slane %v1023, 4
    %v1029 = vshrl.u32 %v989, 16
    %v1031 = vrot.slane %v1029, 7
    %v1032 = vshll.u32 %v989, 16
    %v1034 = vor.u32 %v1031, %v1032
    %v1035 = vsel %vm113, %v1027, %v1034
    %v1036 = vrot.slane %v1031, 4
    %v1038 = vshrl.u32 %v990, 16
    %v1040 = vrot.slane %v1038, 7
    %v1041 = vshll.u32 %v990, 16
    %v1043 = vor.u32 %v1040, %v1041
    %v1044 = vrot.slane %v1040, 4
    %v1046 = vshrl.u32 %v991, 16
    %v1048 = vrot.slane %v1046, 7
    %v1049 = vshll.u32 %v991, 16
    %v1051 = vor.u32 %v1048, %v1049
    %v1052 = vsel %vm113, %v1044, %v1051
    %v1053 = vrot.slane %v1048, 4
    %v1060 = vld [vmem:[#allocation3 + $0x4] sm:$0xf]
    %v1061 = vsel %vm155, %v1026, %v1060
    %1062 = vst [vmem:[#allocation3 + $0x4] sm:$0xf] %v1061
    %1063 = vst [vmem:[#allocation3 + $0x10] sm:$0xf] %v1035
    %v1064 = vld [vmem:[#allocation3 + $0x1c] sm:$0x1]
    %v1065 = vsel %vm160, %v1036, %v1064
    %1066 = vst [vmem:[#allocation3 + $0x1c] sm:$0x1] %v1065
    %v1067 = vld [vmem:[#allocation3 + $0x28] sm:$0xf]
    %v1068 = vsel %vm155, %v1043, %v1067
    %1069 = vst [vmem:[#allocation3 + $0x28] sm:$0xf] %v1068
    %1070 = vst [vmem:[#allocation3 + $0x34] sm:$0xf] %v1052
    %v1071 = vld [vmem:[#allocation3 + $0x40] sm:$0x1]
    %v1072 = vsel %vm160, %v1053, %v1071
    %1073 = vst [vmem:[#allocation3 + $0x40] sm:$0x1] %v1072
    %1078 = vst [vmem:[#allocation3 + $0x8] sm:$0xf] %v988
    %1079 = vst [vmem:[#allocation3 + $0x14] sm:$0xf] %v989
    %1080 = vst [vmem:[#allocation3 + $0x2c] sm:$0xf] %v990
    %1081 = vst [vmem:[#allocation3 + $0x38] sm:$0xf] %v991
    %v1082 = vld [vmem:[#allocation3 + $0x20] sm:$0x1]
    %v1083 = vsel %vm160, 0, %v1082
    %1084 = vst [vmem:[#allocation3 + $0x20] sm:$0x1] %v1083
    %v1085 = vld [vmem:[#allocation3 + $0x44] sm:$0x1]
    %v1086 = vsel %vm160, 0, %v1085
    %1087 = vst [vmem:[#allocation3 + $0x44] sm:$0x1] %v1086
    %v1088 = vld [vmem:[#allocation3] sm:$0xff]
    %v1089 = vld [vmem:[#allocation3 + $0x8] sm:$0xf]
    %v1090 = vld [vmem:[#allocation3 + $0xc] sm:$0xff]
    %v1091 = vld [vmem:[#allocation3 + $0x14] sm:$0xf]
    %v1092 = vld [vmem:[#allocation3 + $0x18] sm:$0x11]
    %v1093 = vld [vmem:[#allocation3 + $0x20] sm:$0x1]
    %v1094 = vld [vmem:[#allocation3 + $0x24] sm:$0xff]
    %v1095 = vld [vmem:[#allocation3 + $0x2c] sm:$0xf]
    %v1096 = vld [vmem:[#allocation3 + $0x30] sm:$0xff]
    %v1097 = vld [vmem:[#allocation3 + $0x38] sm:$0xf]
    %v1098 = vld [vmem:[#allocation3 + $0x3c] sm:$0x11]
    %v1099 = vld [vmem:[#allocation3 + $0x44] sm:$0x1]
    %v1101 = vshrl.u32 %v1088, 16
    %v1103 = vrot.slane %v1101, 4
    %v1104 = vshll.u32 %v1088, 16
    %v1106 = vrot.slane %v1104, 5
    %v1107 = vor.u32 %v1103, %v1106
    %v1108 = vrot.slane %v1107, 4
    %v1110 = vshll.u32 %v1090, 16
    %v1112 = vrot.slane %v1110, 5
    %v1113 = vsel %vm199, %v1108, %v1112
    %v1115 = vshrl.u32 %v1089, 16
    %v1117 = vrot.slane %v1115, 4
    %v1118 = vshll.u32 %v1089, 16
    %v1120 = vrot.slane %v1118, 5
    %v1121 = vor.u32 %v1117, %v1120
    %v1122 = vrot.slane %v1121, 4
    %v1124 = vshll.u32 %v1091, 16
    %v1126 = vrot.slane %v1124, 5
    %v1127 = vsel %vm199, %v1122, %v1126
    %v1128 = vshrl.u32 %v1090, 16
    %v1130 = vrot.slane %v1128, 4
    %v1131 = vor.u32 %v1130, %v1112
    %v1132 = vrot.slane %v1131, 4
    %v1134 = vshll.u32 %v1092, 16
    %v1136 = vrot.slane %v1134, 5
    %v1137 = vsel %vm199, %v1132, %v1136
    %v1138 = vshrl.u32 %v1091, 16
    %v1140 = vrot.slane %v1138, 4
    %v1141 = vor.u32 %v1140, %v1126
    %v1142 = vrot.slane %v1141, 4
    %v1144 = vshll.u32 %v1093, 16
    %v1146 = vrot.slane %v1144, 5
    %v1147 = vsel %vm199, %v1142, %v1146
    %v1149 = vshrl.u32 %v1094, 16
    %v1151 = vrot.slane %v1149, 4
    %v1152 = vshll.u32 %v1094, 16
    %v1154 = vrot.slane %v1152, 5
    %v1155 = vor.u32 %v1151, %v1154
    %v1156 = vrot.slane %v1155, 4
    %v1158 = vshll.u32 %v1096, 16
    %v1160 = vrot.slane %v1158, 5
    %v1161 = vsel %vm199, %v1156, %v1160
    %v1163 = vshrl.u32 %v1095, 16
    %v1165 = vrot.slane %v1163, 4
    %v1166 = vshll.u32 %v1095, 16
    %v1168 = vrot.slane %v1166, 5
    %v1169 = vor.u32 %v1165, %v1168
    %v1170 = vrot.slane %v1169, 4
    %v1172 = vshll.u32 %v1097, 16
    %v1174 = vrot.slane %v1172, 5
    %v1175 = vsel %vm199, %v1170, %v1174
    %v1176 = vshrl.u32 %v1096, 16
    %v1178 = vrot.slane %v1176, 4
    %v1179 = vor.u32 %v1178, %v1160
    %v1180 = vrot.slane %v1179, 4
    %v1182 = vshll.u32 %v1098, 16
    %v1184 = vrot.slane %v1182, 5
    %v1185 = vsel %vm199, %v1180, %v1184
    %v1186 = vshrl.u32 %v1097, 16
    %v1188 = vrot.slane %v1186, 4
    %v1189 = vor.u32 %v1188, %v1174
    %v1190 = vrot.slane %v1189, 4
    %v1192 = vshll.u32 %v1099, 16
    %v1194 = vrot.slane %v1192, 5
    %v1195 = vsel %vm199, %v1190, %v1194
    %v1196 = vld [vmem:[#allocation7] sm:$0xf]
    %v1197 = vld [vmem:[#allocation7 + $0x4] sm:$0xf]
    %v1198 = vld [vmem:[#allocation7 + $0x8] sm:$0xf]
    %v1199 = vld [vmem:[#allocation7 + $0xc] sm:$0xf]
    %v1200 = vld [vmem:[#allocation7 + $0x10] sm:$0xf]
    %v1201 = vld [vmem:[#allocation7 + $0x14] sm:$0xf]
    %v1202 = vld [vmem:[#allocation7 + $0x18] sm:$0xf]
    %v1203 = vld [vmem:[#allocation7 + $0x1c] sm:$0xf]
    %v1204 = vld [vmem:[#allocation7 + $0x20] sm:$0xf]
    %v1205 = vld [vmem:[#allocation7 + $0x24] sm:$0xf]
    %v1206 = vld [vmem:[#allocation7 + $0x28] sm:$0xf]
    %v1207 = vld [vmem:[#allocation7 + $0x2c] sm:$0xf]
    %v1208 = vld [vmem:[#allocation7 + $0x30] sm:$0xf]
    %v1209 = vld [vmem:[#allocation7 + $0x34] sm:$0xf]
    %v1210 = vld [vmem:[#allocation7 + $0x38] sm:$0xf]
    %v1211 = vld [vmem:[#allocation7 + $0x3c] sm:$0xf]
    %v1212 = vld [vmem:[#allocation7 + $0x40] sm:$0xf]
    %v1213 = vld [vmem:[#allocation7 + $0x44] sm:$0xf]
    %v1214 = vld [vmem:[#allocation7 + $0x48] sm:$0xf]
    %v1215 = vld [vmem:[#allocation7 + $0x4c] sm:$0xf]
    %v1216 = vld [vmem:[#allocation7 + $0x50] sm:$0xf]
    %v1217 = vld [vmem:[#allocation7 + $0x54] sm:$0xf]
    %v1218 = vld [vmem:[#allocation7 + $0x58] sm:$0xf]
    %v1219 = vld [vmem:[#allocation7 + $0x5c] sm:$0xf]
    %v1220 = vld [vmem:[#allocation7 + $0x60] sm:$0xf]
    %v1221 = vld [vmem:[#allocation7 + $0x64] sm:$0xf]
    %v1222 = vld [vmem:[#allocation7 + $0x68] sm:$0xf]
    %v1223 = vld [vmem:[#allocation7 + $0x6c] sm:$0xf]
    %v1224 = vld [vmem:[#allocation7 + $0x70] sm:$0xf]
    %v1225 = vld [vmem:[#allocation7 + $0x74] sm:$0xf]
    %v1226 = vld [vmem:[#allocation7 + $0x78] sm:$0xf]
    %v1227 = vld [vmem:[#allocation7 + $0x7c] sm:$0xf]
    %v1228 = vld [vmem:[#allocation7 + $0x80] sm:$0xf]
    %v1229 = vld [vmem:[#allocation7 + $0x84] sm:$0xf]
    %v1230 = vld [vmem:[#allocation7 + $0x88] sm:$0xf]
    %v1231 = vld [vmem:[#allocation7 + $0x8c] sm:$0xf]
    %v1232 = vld [vmem:[#allocation7 + $0x90] sm:$0xf]
    %v1233 = vld [vmem:[#allocation7 + $0x94] sm:$0xf]
    %v1234 = vld [vmem:[#allocation7 + $0x98] sm:$0xf]
    %v1235 = vld [vmem:[#allocation7 + $0x9c] sm:$0xf]
    %v1236 = vld [vmem:[#allocation7 + $0xa0] sm:$0xf]
    %v1237 = vld [vmem:[#allocation7 + $0xa4] sm:$0xf]
    %v1238 = vld [vmem:[#allocation7 + $0xa8] sm:$0xf]
    %v1239 = vld [vmem:[#allocation7 + $0xac] sm:$0xf]
    %v1240 = vld [vmem:[#allocation7 + $0xb0] sm:$0xf]
    %v1241 = vld [vmem:[#allocation7 + $0xb4] sm:$0xf]
    %v1242 = vld [vmem:[#allocation7 + $0xb8] sm:$0xf]
    %v1243 = vld [vmem:[#allocation7 + $0xbc] sm:$0xf]
    %v1244 = vunpack.c.l.b16 %v1113
    %v1245 = vunpack.c.h.b16 %v1113
    %v1246 = vunpack.c.l.b16 %v1127
    %v1247 = vunpack.c.l.b16 %v1137
    %v1248 = vunpack.c.h.b16 %v1137
    %v1249 = vunpack.c.l.b16 %v1147
    %v1250 = vunpack.c.l.b16 %v1161
    %v1251 = vunpack.c.h.b16 %v1161
    %v1252 = vunpack.c.l.b16 %v1175
    %v1253 = vunpack.c.l.b16 %v1185
    %v1254 = vunpack.c.h.b16 %v1185
    %v1255 = vunpack.c.l.b16 %v1195
    %v1256 = vpack.c.b16 %v1247, %v1244
    %v1257 = vpack.c.b16 %v1248, %v1245
    %v1258 = vpack.c.b16 %v1249, %v1246
    %v1259 = vpack.c.b16 %v1253, %v1250
    %v1260 = vpack.c.b16 %v1254, %v1251
    %v1261 = vpack.c.b16 %v1255, %v1252
    %v1316 = vunpack.c.l.b16 %v1196
    %v1317 = vunpack.c.l.b16 %v1197
    %v1318 = vunpack.c.l.b16 %v1198
    %v1319 = vunpack.c.l.b16 %v1199
    %v1320 = vunpack.c.l.b16 %v1200
    %v1321 = vunpack.c.l.b16 %v1201
    %v1322 = vunpack.c.l.b16 %v1202
    %v1323 = vunpack.c.l.b16 %v1203
    %v1324 = vunpack.c.l.b16 %v1204
    %v1325 = vunpack.c.l.b16 %v1205
    %v1326 = vunpack.c.l.b16 %v1206
    %v1327 = vunpack.c.l.b16 %v1207
    %v1328 = vunpack.c.l.b16 %v1208
    %v1329 = vunpack.c.l.b16 %v1209
    %v1330 = vunpack.c.l.b16 %v1210
    %v1331 = vunpack.c.l.b16 %v1211
    %v1332 = vunpack.c.l.b16 %v1212
    %v1333 = vunpack.c.l.b16 %v1213
    %v1334 = vunpack.c.l.b16 %v1214
    %v1335 = vunpack.c.l.b16 %v1215
    %v1336 = vunpack.c.l.b16 %v1216
    %v1337 = vunpack.c.l.b16 %v1217
    %v1338 = vunpack.c.l.b16 %v1218
    %v1339 = vunpack.c.l.b16 %v1219
    %v1340 = vunpack.c.l.b16 %v1220
    %v1341 = vunpack.c.l.b16 %v1221
    %v1342 = vunpack.c.l.b16 %v1222
    %v1343 = vunpack.c.l.b16 %v1223
    %v1344 = vunpack.c.l.b16 %v1224
    %v1345 = vunpack.c.l.b16 %v1225
    %v1346 = vunpack.c.l.b16 %v1226
    %v1347 = vunpack.c.l.b16 %v1227
    %v1348 = vunpack.c.l.b16 %v1228
    %v1349 = vunpack.c.l.b16 %v1229
    %v1350 = vunpack.c.l.b16 %v1230
    %v1351 = vunpack.c.l.b16 %v1231
    %v1352 = vunpack.c.l.b16 %v1232
    %v1353 = vunpack.c.l.b16 %v1233
    %v1354 = vunpack.c.l.b16 %v1234
    %v1355 = vunpack.c.l.b16 %v1235
    %v1356 = vunpack.c.l.b16 %v1236
    %v1357 = vunpack.c.l.b16 %v1237
    %v1358 = vunpack.c.l.b16 %v1238
    %v1359 = vunpack.c.l.b16 %v1239
    %v1360 = vunpack.c.l.b16 %v1240
    %v1361 = vunpack.c.l.b16 %v1241
    %v1362 = vunpack.c.l.b16 %v1242
    %v1363 = vunpack.c.l.b16 %v1243
    %v1364 = vpack.c.b16 %v1317, %v1316
    %v1365 = vpack.c.b16 %v1319, %v1318
    %v1366 = vpack.c.b16 %v1321, %v1320
    %v1367 = vpack.c.b16 %v1323, %v1322
    %v1368 = vpack.c.b16 %v1325, %v1324
    %v1369 = vpack.c.b16 %v1327, %v1326
    %v1370 = vpack.c.b16 %v1329, %v1328
    %v1371 = vpack.c.b16 %v1331, %v1330
    %v1372 = vpack.c.b16 %v1333, %v1332
    %v1373 = vpack.c.b16 %v1335, %v1334
    %v1374 = vpack.c.b16 %v1337, %v1336
    %v1375 = vpack.c.b16 %v1339, %v1338
    %v1376 = vpack.c.b16 %v1341, %v1340
    %v1377 = vpack.c.b16 %v1343, %v1342
    %v1378 = vpack.c.b16 %v1345, %v1344
    %v1379 = vpack.c.b16 %v1347, %v1346
    %v1380 = vpack.c.b16 %v1349, %v1348
    %v1381 = vpack.c.b16 %v1351, %v1350
    %v1382 = vpack.c.b16 %v1353, %v1352
    %v1383 = vpack.c.b16 %v1355, %v1354
    %v1384 = vpack.c.b16 %v1357, %v1356
    %v1385 = vpack.c.b16 %v1359, %v1358
    %v1386 = vpack.c.b16 %v1361, %v1360
    %v1387 = vpack.c.b16 %v1363, %v1362
    %1412 = vmatprep.subr.bf16.mxu0 0
    %1413 = vmatpush1.bf16.msra.mxu0 %v1371
    %1414 = vmatprep.subr.bf16.mxu0 0
    %1415 = vmatpush1.bf16.msra.mxu0 %v1370
    %1416 = vmatprep.subr.bf16.mxu0 0
    %1417 = vmatpush1.bf16.msra.mxu0 %v1369
    %1418 = vmatprep.subr.bf16.mxu0 0
    %1419 = vmatpush1.bf16.msra.mxu0 %v1368
    %1420 = vmatprep.subr.bf16.mxu0 0
    %1421 = vmatpush1.bf16.msra.mxu0 %v1367
    %1422 = vmatprep.subr.bf16.mxu0 0
    %1423 = vmatpush1.bf16.msra.mxu0 %v1366
    %1424 = vmatprep.subr.bf16.mxu0 0
    %1425 = vmatpush1.bf16.msra.mxu0 %v1365
    %1426 = vmatprep.subr.bf16.mxu0 0
    %1427 = vmatpush1.bf16.msra.mxu0 %v1364
    %1428 = vmatprep.subr.bf16.mxu0 0
    %1429 = vmatpush2.bf16.msra.mxu0 %v1379
    %1430 = vmatprep.subr.bf16.mxu0 0
    %1431 = vmatpush2.bf16.msra.mxu0 %v1378
    %1432 = vmatprep.subr.bf16.mxu0 0
    %1433 = vmatpush2.bf16.msra.mxu0 %v1377
    %1434 = vmatprep.subr.bf16.mxu0 0
    %1435 = vmatpush2.bf16.msra.mxu0 %v1376
    %1436 = vmatprep.subr.bf16.mxu0 0
    %1437 = vmatpush2.bf16.msra.mxu0 %v1375
    %1438 = vmatprep.subr.bf16.mxu0 0
    %1439 = vmatpush2.bf16.msra.mxu0 %v1374
    %1440 = vmatprep.subr.bf16.mxu0 0
    %1441 = vmatpush2.bf16.msra.mxu0 %v1373
    %1442 = vmatprep.subr.bf16.mxu0 0
    %1443 = vmatpush2.bf16.msra.mxu0 %v1372
    %1444 = vmatprep.mubr.bf16.mxu0 %v1257
    %1445 = vmatmul.mubr.bf16.gmra.mxu0 %v1256
    %v1446 = vpop.f32.mrf.mxu0
    %v1447 = vadd.f32 0.0, %v1446
    %v1448 = vpop.f32.mrf.mxu0
    %v1449 = vpop.f32.mrf.mxu0
    %v1450 = vadd.f32 0.0, %v1449
    %v1451 = vpop.f32.mrf.mxu0
    %1452 = vmatprep.mubr.bf16.mxu0 %v1260
    %1453 = vmatmul.mubr.bf16.gmra.mxu0 %v1259
    %v1454 = vpop.f32.mrf.mxu0
    %v1455 = vadd.f32 0.0, %v1454
    %v1456 = vpop.f32.mrf.mxu0
    %v1457 = vpop.f32.mrf.mxu0
    %v1458 = vadd.f32 0.0, %v1457
    %v1459 = vpop.f32.mrf.mxu0
    %1460 = vdwg.mxu0
    %1461 = vmatprep.subr.bf16.mxu0 0
    %1462 = vmatpush1.bf16.msra.mxu0 %v1387
    %1463 = vmatprep.subr.bf16.mxu0 0
    %1464 = vmatpush1.bf16.msra.mxu0 %v1386
    %1465 = vmatprep.subr.bf16.mxu0 0
    %1466 = vmatpush1.bf16.msra.mxu0 %v1385
    %1467 = vmatprep.subr.bf16.mxu0 0
    %1468 = vmatpush1.bf16.msra.mxu0 %v1384
    %1469 = vmatprep.subr.bf16.mxu0 0
    %1470 = vmatpush1.bf16.msra.mxu0 %v1383
    %1471 = vmatprep.subr.bf16.mxu0 0
    %1472 = vmatpush1.bf16.msra.mxu0 %v1382
    %1473 = vmatprep.subr.bf16.mxu0 0
    %1474 = vmatpush1.bf16.msra.mxu0 %v1381
    %1475 = vmatprep.subr.bf16.mxu0 0
    %1476 = vmatpush1.bf16.msra.mxu0 %v1380
    %1477 = vmatprep.subr.bf16.mxu0 0
    %1478 = vmatpush2.bf16.msra.mxu0 0
    %1479 = vmatprep.subr.bf16.mxu0 0
    %1480 = vmatpush2.bf16.msra.mxu0 0
    %1481 = vmatprep.subr.bf16.mxu0 0
    %1482 = vmatpush2.bf16.msra.mxu0 0
    %1483 = vmatprep.subr.bf16.mxu0 0
    %1484 = vmatpush2.bf16.msra.mxu0 0
    %1485 = vmatprep.subr.bf16.mxu0 0
    %1486 = vmatpush2.bf16.msra.mxu0 0
    %1487 = vmatprep.subr.bf16.mxu0 0
    %1488 = vmatpush2.bf16.msra.mxu0 0
    %1489 = vmatprep.subr.bf16.mxu0 0
    %1490 = vmatpush2.bf16.msra.mxu0 0
    %1491 = vmatprep.subr.bf16.mxu0 0
    %1492 = vmatpush2.bf16.msra.mxu0 0
    %1493 = vmatprep.mubr.bf16.mxu0 0
    %1494 = vmatmul.mubr.bf16.gmra.mxu0 %v1258
    %v1495 = vpop.f32.mrf.mxu0
    %v1496 = vadd.f32 %v1447, %v1495
    %v1497 = vpop.f32.mrf.mxu0
    %v1498 = vpop.f32.mrf.mxu0
    %v1499 = vadd.f32 %v1450, %v1498
    %v1500 = vpop.f32.mrf.mxu0
    %1501 = vmatprep.mubr.bf16.mxu0 0
    %1502 = vmatmul.mubr.bf16.gmra.mxu0 %v1261
    %v1503 = vpop.f32.mrf.mxu0
    %v1504 = vadd.f32 %v1455, %v1503
    %v1505 = vpop.f32.mrf.mxu0
    %v1506 = vpop.f32.mrf.mxu0
    %v1507 = vadd.f32 %v1458, %v1506
    %v1508 = vpop.f32.mrf.mxu0
    %1509 = vdwg.mxu0
    %v1510 = vadd.f32 %v1496, %v1499
    %v1511 = vadd.f32 %v1510, %v1504
    %v1512 = vadd.f32 %v1511, %v1507
    %v1513 = vrot.slane %v1512, 4
    %v1514 = vadd.f32 %v1512, %v1513
    %v1515 = vrot.slane %v1514, 2
    %v1516 = vadd.f32 %v1514, %v1515
    %v1517 = vrot.slane %v1516, 1
    %v1518 = vadd.f32 %v1516, %v1517
    %v1519 = vmul.f32 %v1496, %v1496
    %v1520 = vmul.f32 %v1499, %v1499
    %v1521 = vmul.f32 %v1504, %v1504
    %v1522 = vmul.f32 %v1507, %v1507
    %v1523 = vadd.f32 %v1519, %v1520
    %v1524 = vadd.f32 %v1523, %v1521
    %v1525 = vadd.f32 %v1524, %v1522
    %v1526 = vrot.slane %v1525, 4
    %v1527 = vadd.f32 %v1525, %v1526
    %v1528 = vrot.slane %v1527, 2
    %v1529 = vadd.f32 %v1527, %v1528
    %v1530 = vrot.slane %v1529, 1
    %v1531 = vadd.f32 %v1529, %v1530
    %v1532 = vld [vmem:[%s3] sm:$0xff]
    %v1533 = vld [vmem:[%s3 + $0x8] sm:$0xff]
    %v1534 = vld [vmem:[%s3 + $0x10] sm:$0xff]
    %v1535 = vld [vmem:[%s3 + $0x18] sm:$0xff]
    %v1536 = vld [vmem:[%s3 + $0x20] sm:$0xff]
    %v1537 = vld [vmem:[%s3 + $0x28] sm:$0xff]
    %v1538 = vld [vmem:[%s3 + $0x30] sm:$0xff]
    %v1539 = vld [vmem:[%s3 + $0x38] sm:$0xff]
    %v1540 = vld [vmem:[%s3 + $0x40] sm:$0xff]
    %v1541 = vld [vmem:[%s3 + $0x48] sm:$0xff]
    %v1542 = vld [vmem:[%s3 + $0x50] sm:$0xff]
    %v1543 = vld [vmem:[%s3 + $0x58] sm:$0xff]
    %v1544 = vld [vmem:[%s3 + $0x60] sm:$0xff]
    %v1545 = vld [vmem:[%s3 + $0x68] sm:$0xff]
    %v1546 = vld [vmem:[%s3 + $0x70] sm:$0xff]
    %v1547 = vld [vmem:[%s3 + $0x78] sm:$0xff]
    %1548 = vmatprep.subr.mxu0 0.0
    %1549 = vmatpush1.msra.mxu0 %v1547
    %1550 = vmatprep.subr.mxu0 0.0
    %1551 = vmatpush1.msra.mxu0 %v1546
    %1552 = vmatprep.subr.mxu0 0.0
    %1553 = vmatpush1.msra.mxu0 %v1545
    %1554 = vmatprep.subr.mxu0 0.0
    %1555 = vmatpush1.msra.mxu0 %v1544
    %1556 = vmatprep.subr.mxu0 0.0
    %1557 = vmatpush1.msra.mxu0 %v1543
    %1558 = vmatprep.subr.mxu0 0.0
    %1559 = vmatpush1.msra.mxu0 %v1542
    %1560 = vmatprep.subr.mxu0 0.0
    %1561 = vmatpush1.msra.mxu0 %v1541
    %1562 = vmatprep.subr.mxu0 0.0
    %1563 = vmatpush1.msra.mxu0 %v1540
    %1564 = vmatprep.subr.mxu0 0.0
    %1565 = vmatpush1.msra.mxu0 %v1539
    %1566 = vmatprep.subr.mxu0 0.0
    %1567 = vmatpush1.msra.mxu0 %v1538
    %1568 = vmatprep.subr.mxu0 0.0
    %1569 = vmatpush1.msra.mxu0 %v1537
    %1570 = vmatprep.subr.mxu0 0.0
    %1571 = vmatpush1.msra.mxu0 %v1536
    %1572 = vmatprep.subr.mxu0 0.0
    %1573 = vmatpush1.msra.mxu0 %v1535
    %1574 = vmatprep.subr.mxu0 0.0
    %1575 = vmatpush1.msra.mxu0 %v1534
    %1576 = vmatprep.subr.mxu0 0.0
    %1577 = vmatpush1.msra.mxu0 %v1533
    %1578 = vmatprep.subr.mxu0 0.0
    %1579 = vmatpush1.msra.mxu0 %v1532
    %1580 = vmatprep.subr.mxu0 0.0
    %1581 = vmatpush2.msra.mxu0 0.0
    %1582 = vmatprep.subr.mxu0 0.0
    %1583 = vmatpush2.msra.mxu0 0.0
    %1584 = vmatprep.subr.mxu0 0.0
    %1585 = vmatpush2.msra.mxu0 0.0
    %1586 = vmatprep.subr.mxu0 0.0
    %1587 = vmatpush2.msra.mxu0 0.0
    %1588 = vmatprep.subr.mxu0 0.0
    %1589 = vmatpush2.msra.mxu0 0.0
    %1590 = vmatprep.subr.mxu0 0.0
    %1591 = vmatpush2.msra.mxu0 0.0
    %1592 = vmatprep.subr.mxu0 0.0
    %1593 = vmatpush2.msra.mxu0 0.0
    %1594 = vmatprep.subr.mxu0 0.0
    %1595 = vmatpush2.msra.mxu0 0.0
    %1596 = vmatprep.subr.mxu0 0.0
    %1597 = vmatpush2.msra.mxu0 0.0
    %1598 = vmatprep.subr.mxu0 0.0
    %1599 = vmatpush2.msra.mxu0 0.0
    %1600 = vmatprep.subr.mxu0 0.0
    %1601 = vmatpush2.msra.mxu0 0.0
    %1602 = vmatprep.subr.mxu0 0.0
    %1603 = vmatpush2.msra.mxu0 0.0
    %1604 = vmatprep.subr.mxu0 0.0
    %1605 = vmatpush2.msra.mxu0 0.0
    %1606 = vmatprep.subr.mxu0 0.0
    %1607 = vmatpush2.msra.mxu0 0.0
    %1608 = vmatprep.subr.mxu0 0.0
    %1609 = vmatpush2.msra.mxu0 0.0
    %1610 = vmatprep.subr.mxu0 0.0
    %1611 = vmatpush2.msra.mxu0 0.0
    %1612 = vmatprep.mubr.f32.mxu0 0.0
    %1613 = vmatmul.mubr.f32.gmra.mxu0 %v1518
    %v1614 = vpop.f32.mrf.mxu0
    %v1615 = vadd.f32 0.0, %v1614
    %v1616 = vpop.f32.mrf.mxu0
    %1617 = vdwg.mxu0
    %1618 = vmatprep.subr.mxu0 0.0
    %1619 = vmatpush1.msra.mxu0 %v1547
    %1620 = vmatprep.subr.mxu0 0.0
    %1621 = vmatpush1.msra.mxu0 %v1546
    %1622 = vmatprep.subr.mxu0 0.0
    %1623 = vmatpush1.msra.mxu0 %v1545
    %1624 = vmatprep.subr.mxu0 0.0
    %1625 = vmatpush1.msra.mxu0 %v1544
    %1626 = vmatprep.subr.mxu0 0.0
    %1627 = vmatpush1.msra.mxu0 %v1543
    %1628 = vmatprep.subr.mxu0 0.0
    %1629 = vmatpush1.msra.mxu0 %v1542
    %1630 = vmatprep.subr.mxu0 0.0
    %1631 = vmatpush1.msra.mxu0 %v1541
    %1632 = vmatprep.subr.mxu0 0.0
    %1633 = vmatpush1.msra.mxu0 %v1540
    %1634 = vmatprep.subr.mxu0 0.0
    %1635 = vmatpush1.msra.mxu0 %v1539
    %1636 = vmatprep.subr.mxu0 0.0
    %1637 = vmatpush1.msra.mxu0 %v1538
    %1638 = vmatprep.subr.mxu0 0.0
    %1639 = vmatpush1.msra.mxu0 %v1537
    %1640 = vmatprep.subr.mxu0 0.0
    %1641 = vmatpush1.msra.mxu0 %v1536
    %1642 = vmatprep.subr.mxu0 0.0
    %1643 = vmatpush1.msra.mxu0 %v1535
    %1644 = vmatprep.subr.mxu0 0.0
    %1645 = vmatpush1.msra.mxu0 %v1534
    %1646 = vmatprep.subr.mxu0 0.0
    %1647 = vmatpush1.msra.mxu0 %v1533
    %1648 = vmatprep.subr.mxu0 0.0
    %1649 = vmatpush1.msra.mxu0 %v1532
    %1650 = vmatprep.subr.mxu0 0.0
    %1651 = vmatpush2.msra.mxu0 0.0
    %1652 = vmatprep.subr.mxu0 0.0
    %1653 = vmatpush2.msra.mxu0 0.0
    %1654 = vmatprep.subr.mxu0 0.0
    %1655 = vmatpush2.msra.mxu0 0.0
    %1656 = vmatprep.subr.mxu0 0.0
    %1657 = vmatpush2.msra.mxu0 0.0
    %1658 = vmatprep.subr.mxu0 0.0
    %1659 = vmatpush2.msra.mxu0 0.0
    %1660 = vmatprep.subr.mxu0 0.0
    %1661 = vmatpush2.msra.mxu0 0.0
    %1662 = vmatprep.subr.mxu0 0.0
    %1663 = vmatpush2.msra.mxu0 0.0
    %1664 = vmatprep.subr.mxu0 0.0
    %1665 = vmatpush2.msra.mxu0 0.0
    %1666 = vmatprep.subr.mxu0 0.0
    %1667 = vmatpush2.msra.mxu0 0.0
    %1668 = vmatprep.subr.mxu0 0.0
    %1669 = vmatpush2.msra.mxu0 0.0
    %1670 = vmatprep.subr.mxu0 0.0
    %1671 = vmatpush2.msra.mxu0 0.0
    %1672 = vmatprep.subr.mxu0 0.0
    %1673 = vmatpush2.msra.mxu0 0.0
    %1674 = vmatprep.subr.mxu0 0.0
    %1675 = vmatpush2.msra.mxu0 0.0
    %1676 = vmatprep.subr.mxu0 0.0
    %1677 = vmatpush2.msra.mxu0 0.0
    %1678 = vmatprep.subr.mxu0 0.0
    %1679 = vmatpush2.msra.mxu0 0.0
    %1680 = vmatprep.subr.mxu0 0.0
    %1681 = vmatpush2.msra.mxu0 0.0
    %1682 = vmatprep.mubr.f32.mxu0 0.0
    %1683 = vmatmul.mubr.f32.gmra.mxu0 %v1531
    %v1684 = vpop.f32.mrf.mxu0
    %v1685 = vadd.f32 0.0, %v1684
    %v1686 = vpop.f32.mrf.mxu0
    %1687 = vdwg.mxu0
    %v1688 = vmul.f32 %v1615, 0.001953125
    %v1689 = vmul.f32 %v1685, 0.001953125
    %v1690 = vmul.f32 %v1688, %v1688
    %v1691 = vsub.f32 %v1689, %v1690
    %v1692 = vmax.f32 %v1691, 0.0
    %v1693 = vld [vmem:[%s7] sm:$0x1]
    %v1694 = vadd.f32 %v1692, 1e-05
    %v1695 = vrsqrt.pop %v1694
    %v1697 = vlaneseq
    %v1698 = vshrl.u32 %v1697, 7
    %v1699 = vsub.s32 0, %v1698
    %v1700 = vrot.slane %v1693, %v1699
    %v1702 = vmul.f32 %v1700, %v1695
    %v1703 = vld [vmem:[%s8] sm:$0x1]
    %v1704 = vmul.f32 %v1688, %v1702
    %v1706 = vlaneseq
    %v1707 = vshrl.u32 %v1706, 7
    %v1708 = vsub.s32 0, %v1707
    %v1709 = vrot.slane %v1703, %v1708
    %v1711 = vsub.f32 %v1709, %v1704
    %v1712 = vld [vmem:[%s4] sm:$0xff]
    %v1714 = vsel %vm813, %v1702, 0
    %1716 = vmatprep.subr.mxu0 0.0
    %1717 = vmatpush1.msra.mxu0 0.0
    %1718 = vmatprep.subr.mxu0 0.0
    %1719 = vmatpush1.msra.mxu0 0.0
    %1720 = vmatprep.subr.mxu0 0.0
    %1721 = vmatpush1.msra.mxu0 0.0
    %1722 = vmatprep.subr.mxu0 0.0
    %1723 = vmatpush1.msra.mxu0 0.0
    %1724 = vmatprep.subr.mxu0 0.0
    %1725 = vmatpush1.msra.mxu0 0.0
    %1726 = vmatprep.subr.mxu0 0.0
    %1727 = vmatpush1.msra.mxu0 0.0
    %1728 = vmatprep.subr.mxu0 0.0
    %1729 = vmatpush1.msra.mxu0 0.0
    %1730 = vmatprep.subr.mxu0 0.0
    %1731 = vmatpush1.msra.mxu0 0.0
    %1732 = vmatprep.subr.mxu0 0.0
    %1733 = vmatpush1.msra.mxu0 0.0
    %1734 = vmatprep.subr.mxu0 0.0
    %1735 = vmatpush1.msra.mxu0 0.0
    %1736 = vmatprep.subr.mxu0 0.0
    %1737 = vmatpush1.msra.mxu0 0.0
    %1738 = vmatprep.subr.mxu0 0.0
    %1739 = vmatpush1.msra.mxu0 0.0
    %1740 = vmatprep.subr.mxu0 0.0
    %1741 = vmatpush1.msra.mxu0 0.0
    %1742 = vmatprep.subr.mxu0 0.0
    %1743 = vmatpush1.msra.mxu0 0.0
    %1744 = vmatprep.subr.mxu0 0.0
    %1745 = vmatpush1.msra.mxu0 0.0
    %1746 = vmatprep.subr.mxu0 0.0
    %1747 = vmatpush1.msra.mxu0 %v1712
    %1748 = vmatprep.subr.mxu0 0.0
    %1749 = vmatpush2.msra.mxu0 0.0
    %1750 = vmatprep.subr.mxu0 0.0
    %1751 = vmatpush2.msra.mxu0 0.0
    %1752 = vmatprep.subr.mxu0 0.0
    %1753 = vmatpush2.msra.mxu0 0.0
    %1754 = vmatprep.subr.mxu0 0.0
    %1755 = vmatpush2.msra.mxu0 0.0
    %1756 = vmatprep.subr.mxu0 0.0
    %1757 = vmatpush2.msra.mxu0 0.0
    %1758 = vmatprep.subr.mxu0 0.0
    %1759 = vmatpush2.msra.mxu0 0.0
    %1760 = vmatprep.subr.mxu0 0.0
    %1761 = vmatpush2.msra.mxu0 0.0
    %1762 = vmatprep.subr.mxu0 0.0
    %1763 = vmatpush2.msra.mxu0 0.0
    %1764 = vmatprep.subr.mxu0 0.0
    %1765 = vmatpush2.msra.mxu0 0.0
    %1766 = vmatprep.subr.mxu0 0.0
    %1767 = vmatpush2.msra.mxu0 0.0
    %1768 = vmatprep.subr.mxu0 0.0
    %1769 = vmatpush2.msra.mxu0 0.0
    %1770 = vmatprep.subr.mxu0 0.0
    %1771 = vmatpush2.msra.mxu0 0.0
    %1772 = vmatprep.subr.mxu0 0.0
    %1773 = vmatpush2.msra.mxu0 0.0
    %1774 = vmatprep.subr.mxu0 0.0
    %1775 = vmatpush2.msra.mxu0 0.0
    %1776 = vmatprep.subr.mxu0 0.0
    %1777 = vmatpush2.msra.mxu0 0.0
    %1778 = vmatprep.subr.mxu0 0.0
    %1779 = vmatpush2.msra.mxu0 0.0
    %1780 = vmatprep.mubr.f32.mxu0 0.0
    %1781 = vmatmul.mubr.f32.gmra.mxu0 %v1714
    %v1782 = vpop.f32.mrf.mxu0
    %v1783 = vadd.f32 0.0, %v1782
    %v1784 = vpop.f32.mrf.mxu0
    %1785 = vdwg.mxu0
    %v1787 = vsel %vm813, %v1711, 0
    %1789 = vmatprep.subr.mxu0 0.0
    %1790 = vmatpush1.msra.mxu0 0.0
    %1791 = vmatprep.subr.mxu0 0.0
    %1792 = vmatpush1.msra.mxu0 0.0
    %1793 = vmatprep.subr.mxu0 0.0
    %1794 = vmatpush1.msra.mxu0 0.0
    %1795 = vmatprep.subr.mxu0 0.0
    %1796 = vmatpush1.msra.mxu0 0.0
    %1797 = vmatprep.subr.mxu0 0.0
    %1798 = vmatpush1.msra.mxu0 0.0
    %1799 = vmatprep.subr.mxu0 0.0
    %1800 = vmatpush1.msra.mxu0 0.0
    %1801 = vmatprep.subr.mxu0 0.0
    %1802 = vmatpush1.msra.mxu0 0.0
    %1803 = vmatprep.subr.mxu0 0.0
    %1804 = vmatpush1.msra.mxu0 0.0
    %1805 = vmatprep.subr.mxu0 0.0
    %1806 = vmatpush1.msra.mxu0 0.0
    %1807 = vmatprep.subr.mxu0 0.0
    %1808 = vmatpush1.msra.mxu0 0.0
    %1809 = vmatprep.subr.mxu0 0.0
    %1810 = vmatpush1.msra.mxu0 0.0
    %1811 = vmatprep.subr.mxu0 0.0
    %1812 = vmatpush1.msra.mxu0 0.0
    %1813 = vmatprep.subr.mxu0 0.0
    %1814 = vmatpush1.msra.mxu0 0.0
    %1815 = vmatprep.subr.mxu0 0.0
    %1816 = vmatpush1.msra.mxu0 0.0
    %1817 = vmatprep.subr.mxu0 0.0
    %1818 = vmatpush1.msra.mxu0 0.0
    %1819 = vmatprep.subr.mxu0 0.0
    %1820 = vmatpush1.msra.mxu0 %v1712
    %1821 = vmatprep.subr.mxu0 0.0
    %1822 = vmatpush2.msra.mxu0 0.0
    %1823 = vmatprep.subr.mxu0 0.0
    %1824 = vmatpush2.msra.mxu0 0.0
    %1825 = vmatprep.subr.mxu0 0.0
    %1826 = vmatpush2.msra.mxu0 0.0
    %1827 = vmatprep.subr.mxu0 0.0
    %1828 = vmatpush2.msra.mxu0 0.0
    %1829 = vmatprep.subr.mxu0 0.0
    %1830 = vmatpush2.msra.mxu0 0.0
    %1831 = vmatprep.subr.mxu0 0.0
    %1832 = vmatpush2.msra.mxu0 0.0
    %1833 = vmatprep.subr.mxu0 0.0
    %1834 = vmatpush2.msra.mxu0 0.0
    %1835 = vmatprep.subr.mxu0 0.0
    %1836 = vmatpush2.msra.mxu0 0.0
    %1837 = vmatprep.subr.mxu0 0.0
    %1838 = vmatpush2.msra.mxu0 0.0
    %1839 = vmatprep.subr.mxu0 0.0
    %1840 = vmatpush2.msra.mxu0 0.0
    %1841 = vmatprep.subr.mxu0 0.0
    %1842 = vmatpush2.msra.mxu0 0.0
    %1843 = vmatprep.subr.mxu0 0.0
    %1844 = vmatpush2.msra.mxu0 0.0
    %1845 = vmatprep.subr.mxu0 0.0
    %1846 = vmatpush2.msra.mxu0 0.0
    %1847 = vmatprep.subr.mxu0 0.0
    %1848 = vmatpush2.msra.mxu0 0.0
    %1849 = vmatprep.subr.mxu0 0.0
    %1850 = vmatpush2.msra.mxu0 0.0
    %1851 = vmatprep.subr.mxu0 0.0
    %1852 = vmatpush2.msra.mxu0 0.0
    %1853 = vmatprep.mubr.f32.mxu0 0.0
    %1854 = vmatmul.mubr.f32.gmra.mxu0 %v1787
    %v1855 = vpop.f32.mrf.mxu0
    %v1856 = vadd.f32 0.0, %v1855
    %v1857 = vpop.f32.mrf.mxu0
    %1858 = vdwg.mxu0
    %v1859 = vlaneseq
    %v1860 = vshrl.u32 %v1859, 7
    %v1861 = vsub.s32 0, %v1860
    %v1862 = vrot.slane %v1783, %v1861
    %v1863 = vmul.f32 %v1496, %v1862
    %v1864 = vmul.f32 %v1499, %v1862
    %v1865 = vmul.f32 %v1504, %v1862
    %v1866 = vmul.f32 %v1507, %v1862
    %v1867 = vlaneseq
    %v1868 = vshrl.u32 %v1867, 7
    %v1869 = vsub.s32 0, %v1868
    %v1870 = vrot.slane %v1856, %v1869
    %v1871 = vadd.f32 %v1863, %v1870
    %v1872 = vadd.f32 %v1864, %v1870
    %v1873 = vadd.f32 %v1865, %v1870
    %v1874 = vadd.f32 %v1866, %v1870
    %v1875 = vmax.f32 %v1871, 0.0
    %v1876 = vmax.f32 %v1872, 0.0
    %v1877 = vmax.f32 %v1873, 0.0
    %v1878 = vmax.f32 %v1874, 0.0
    %1879 = vst [vmem:[#allocation9] sm:$0xff] %v1875
    %1880 = vst [vmem:[#allocation9 + $0x8] sm:$0xff] %v1876
    %1881 = vst [vmem:[#allocation9 + $0x10] sm:$0xff] %v1877
    %1882 = vst [vmem:[#allocation9 + $0x18] sm:$0xff] %v1878
    // Predicated region
    $region46: #{tpu_custom_call.1} parent=1 // pred_check
      _
    $region47: #{tpu_custom_call.1} parent=1 // pred_check_branch
      %1884 = sbr.rel (0) target = $region49
    $region48: #{tpu_custom_call.1} parent=1 // pred_region
      %s1886 = ssub.s32 512, 512
      %1887 = vsyncadd [#allocation6], %s1886
      %s1888 = sshll.u32 [#allocation9], 4
      %s1889 = int_to_ptr.vmem [resolvable:$true] %s1888
      %1894 = dma.vmem_to_hbm [thread:$0]  %s1889, 512, %s9, [#allocation6], 128, 128, 8
    $region49: #{tpu_custom_call.1} parent=1 // pred_fallthru
      _
    // Predicated region
    $region50: #{tpu_custom_call.1} parent=1 // pred_check
      _
    $region51: #{tpu_custom_call.1} parent=1 // pred_check_branch
      %1896 = sbr.rel (0) target = $region53
    $region52: #{tpu_custom_call.1} parent=1 // pred_region
      %1897 = dma.done [#allocation6], 512
    $region53: #{tpu_custom_call.1} parent=1 // pred_fallthru
      _
    %1898 = vsyncpa [#allocation5], 1
    %1899 = vsyncpa [#allocation8], 1
    %1900 = vsyncpa [#allocation6], 1

</llo_original>
